<compile_context>
chip_gen: v6e
topology: v6e:2x2x1
jax: 0.10.0
libtpu: 0.0.40
codegen_flags: <defaults>
</compile_context>

<pallas_src>
import numpy as np
import jax
import jax.numpy as jnp
from jax import lax
from jax.experimental import pallas as pl
from jax.experimental.pallas import tpu as pltpu


def lstm_kernel(x_ref, h0_ref, c0_ref, wih_ref, whh_ref, b_ref,
                wout_ref, bout_ref,
                out_ref, hn_ref, cn_ref,
                xproj_ref, hist_ref):
    # x_ref:    (T, Bp, 1)   raw input, time-major, padded batch (I = 1)
    # h0_ref:   (Bp, H)      initial hidden
    # c0_ref:   (Bp, H)      initial cell
    # wih_ref:  (1, 4H)      W_ih^T, g-gate columns pre-scaled by 2
    # whh_ref:  (H, 4H)      W_hh^T, g-gate columns pre-scaled by 2
    # b_ref:    (1, 4H)      b_ih + b_hh, g-gate lanes pre-scaled by 2
    # wout_ref: (1, H)       Linear(H, 1) weight
    # bout_ref: (1,) SMEM    Linear bias (scalar)
    # out_ref:  (T, Bp)      projected outputs
    # hn_ref:   (Bp, H)      final hidden
    # cn_ref:   (Bp, H)      final cell
    # xproj_ref:(T, Bp, 4H)  VMEM scratch: input projection + bias
    # hist_ref: (T, Bp, H)   VMEM scratch: hidden-state history
    T = x_ref.shape[0]
    H = h0_ref.shape[1]
    GH = 4 * H

    # ---- Prologue: input projection (I = 1 -> broadcast mul) + bias, done
    # entirely in VMEM, off the serial critical path.
    wih3 = wih_ref[...].reshape(1, 1, GH)
    b3 = b_ref[...].reshape(1, 1, GH)
    xproj_ref[...] = x_ref[...] * wih3 + b3          # (T,Bp,1)*(1,1,4H)

    # Resident recurrent weight (single VMEM value reused every step).
    whh = whh_ref[...]                               # (H, 4H)

    def step(t, carry):
        h, c = carry
        # Only recurrent matmul on the critical path: (Bp, H) @ (H, 4H).
        gates = xproj_ref[t] + jnp.dot(h, whh,
                                       preferred_element_type=jnp.float32)
        # One sigmoid over all 4H = 128 gate lanes.  The g-gate inputs were
        # pre-scaled by 2, so tanh(z_g) = 2*sigmoid(2 z_g) - 1 (VPU only).
        # PyTorch gate order: i, f, g, o.
        sig = jax.nn.sigmoid(gates)
        i_g = sig[:, 0:H]
        f_g = sig[:, H:2 * H]
        g_g = 2.0 * sig[:, 2 * H:3 * H] - 1.0
        o_g = sig[:, 3 * H:4 * H]
        c_new = f_g * c + i_g * g_g
        h_new = o_g * jnp.tanh(c_new)
        hist_ref[t] = h_new
        return (h_new, c_new)

    # T is static and small -> full unroll so the LLO scheduler can overlap
    # xproj loads / hist stores of adjacent iterations.
    h_fin, c_fin = lax.fori_loop(0, T, step, (h0_ref[...], c0_ref[...]),
                                 unroll=True)
    hn_ref[...] = h_fin
    cn_ref[...] = c_fin

    # ---- Epilogue: Linear(H, 1) as VPU mul + lane reduce over the whole
    # history at once; hist never leaves VMEM.
    wout3 = wout_ref[...].reshape(1, 1, H)
    out_ref[...] = jnp.sum(hist_ref[...] * wout3, axis=-1) + bout_ref[0]


@jax.jit
def rnn_forward(x, h_state, params):
    """Equivalent of RNN.forward(x, h_state) with type='LSTM', num_layers=1.

    x: (B, T, 1) float32, h_state: (h0, c0) each (1, B, H).
    Returns (outs (B, T, 1), (h_n (1, B, H), c_n (1, B, H))).
    """
    h0, c0 = h_state
    B, T, I = x.shape
    H = h0.shape[-1]
    assert I == 1, "kernel specialized for input_size=1 (module default)"
    Bp = ((B + 7) // 8) * 8                       # pad batch to sublane group

    # Pre-scale the g-gate columns (2H:3H) by 2 so the kernel needs a single
    # sigmoid pass (tanh recovered on the VPU).  Tiny elementwise ops; fused
    # / constant-folded under jit.
    gscale = jnp.concatenate([jnp.ones((2 * H,), jnp.float32),
                              jnp.full((H,), 2.0, jnp.float32),
                              jnp.ones((H,), jnp.float32)])
    wih_t = params["w_ih"].T.astype(jnp.float32) * gscale          # (1, 4H)
    whh_t = params["w_hh"].T.astype(jnp.float32) * gscale          # (H, 4H)
    b = ((params["b_ih"] + params["b_hh"]).astype(jnp.float32)
         * gscale).reshape(1, 4 * H)                               # (1, 4H)
    wout = params["w_out"].astype(jnp.float32).reshape(1, H)       # (1, H)
    bout = params["b_out"].astype(jnp.float32).reshape(1,)         # (1,)

    # Time-major input, padded batch (padded rows are discarded afterwards).
    x_t = jnp.transpose(x.astype(jnp.float32), (1, 0, 2))          # (T, B, 1)
    h0_2d = h0.reshape(B, H).astype(jnp.float32)
    c0_2d = c0.reshape(B, H).astype(jnp.float32)
    if Bp != B:
        x_t = jnp.pad(x_t, ((0, 0), (0, Bp - B), (0, 0)))
        h0_2d = jnp.pad(h0_2d, ((0, Bp - B), (0, 0)))
        c0_2d = jnp.pad(c0_2d, ((0, Bp - B), (0, 0)))

    vspec = pl.BlockSpec(memory_space=pltpu.MemorySpace.VMEM)
    sspec = pl.BlockSpec(memory_space=pltpu.MemorySpace.SMEM)

    out_tb, h_n, c_n = pl.pallas_call(
        lstm_kernel,
        out_shape=(
            jax.ShapeDtypeStruct((T, Bp), jnp.float32),
            jax.ShapeDtypeStruct((Bp, H), jnp.float32),
            jax.ShapeDtypeStruct((Bp, H), jnp.float32),
        ),
        in_specs=[vspec, vspec, vspec, vspec, vspec, vspec, vspec, sspec],
        out_specs=(vspec, vspec, vspec),
        scratch_shapes=[
            pltpu.VMEM((T, Bp, 4 * H), jnp.float32),   # xproj
            pltpu.VMEM((T, Bp, H), jnp.float32),       # hidden history
        ],
    )(x_t, h0_2d, c0_2d, wih_t, whh_t, b, wout, bout)

    outs = jnp.transpose(out_tb[:, :B], (1, 0)).reshape(B, T, 1)
    h_n = h_n[:B].reshape(1, B, H)
    c_n = c_n[:B].reshape(1, B, H)
    return outs, (h_n, c_n)


def lstm_ref(x, h0, c0, params):
    """Pure-JAX reference (mirrors torch.nn.LSTM + nn.Linear), exact f32."""
    B, T, I = x.shape
    H = h0.shape[-1]
    hi = jax.lax.Precision.HIGHEST
    b = params["b_ih"] + params["b_hh"]
    h = h0.reshape(B, H)
    c = c0.reshape(B, H)
    outs = []
    for t in range(T):
        gates = (jnp.dot(x[:, t, :], params["w_ih"].T, precision=hi)
                 + jnp.dot(h, params["w_hh"].T, precision=hi) + b)
        i_g = jax.nn.sigmoid(gates[:, 0:H])
        f_g = jax.nn.sigmoid(gates[:, H:2 * H])
        g_g = jnp.tanh(gates[:, 2 * H:3 * H])
        o_g = jax.nn.sigmoid(gates[:, 3 * H:4 * H])
        c = f_g * c + i_g * g_g
        h = o_g * jnp.tanh(c)
        outs.append(jnp.dot(h, params["w_out"].T, precision=hi)
                    + params["b_out"])
    return jnp.stack(outs, axis=1), h, c


def init_params(key, input_size=1, hidden_size=32):
    k = 1.0 / np.sqrt(hidden_size)
    keys = jax.random.split(key, 6)
    u = lambda kk, shape: jax.random.uniform(kk, shape, jnp.float32, -k, k)
    return {
        "w_ih": u(keys[0], (4 * hidden_size, input_size)),
        "w_hh": u(keys[1], (4 * hidden_size, hidden_size)),
        "b_ih": u(keys[2], (4 * hidden_size,)),
        "b_hh": u(keys[3], (4 * hidden_size,)),
        "w_out": u(keys[4], (1, hidden_size)),
        "b_out": u(keys[5], (1,)),
    }


if __name__ == "__main__":
    B, T, I, H = 2, 8, 1, 32
    key = jax.random.PRNGKey(0)
    kx, kh, kc, kp = jax.random.split(key, 4)

    x = jax.random.normal(kx, (B, T, I), jnp.float32)
    h0 = jax.random.normal(kh, (1, B, H), jnp.float32) * 0.1
    c0 = jax.random.normal(kc, (1, B, H), jnp.float32) * 0.1
    params = init_params(kp, input_size=I, hidden_size=H)

    outs, (h_n, c_n) = rnn_forward(x, (h0, c0), params)
    jax.block_until_ready((outs, h_n, c_n))

    ref_outs, ref_h, ref_c = lstm_ref(x, h0, c0, params)
    np.testing.assert_allclose(np.asarray(outs), np.asarray(ref_outs),
                               rtol=2e-5, atol=2e-5)
    np.testing.assert_allclose(np.asarray(h_n[0]), np.asarray(ref_h),
                               rtol=2e-5, atol=2e-5)
    np.testing.assert_allclose(np.asarray(c_n[0]), np.asarray(ref_c),
                               rtol=2e-5, atol=2e-5)

    print("KERNEL_OK")
</pallas_src>

<mosaic_0001>
module attributes {stable_mosaic.version = 11 : i64} {
  func.func @lstm_kernel(%arg0: memref<8x8x1xf32, #tpu.memory_space<vmem>>, %arg1: memref<8x32xf32, #tpu.memory_space<vmem>>, %arg2: memref<8x32xf32, #tpu.memory_space<vmem>>, %arg3: memref<1x128xf32, #tpu.memory_space<vmem>>, %arg4: memref<32x128xf32, #tpu.memory_space<vmem>>, %arg5: memref<1x128xf32, #tpu.memory_space<vmem>>, %arg6: memref<1x32xf32, #tpu.memory_space<vmem>>, %arg7: memref<1xf32, #tpu.memory_space<smem>>, %arg8: memref<8x8xf32, #tpu.memory_space<vmem>>, %arg9: memref<8x32xf32, #tpu.memory_space<vmem>>, %arg10: memref<8x32xf32, #tpu.memory_space<vmem>>, %arg11: memref<8x8x128xf32, #tpu.memory_space<vmem>>, %arg12: memref<8x8x32xf32, #tpu.memory_space<vmem>>) attributes {dimension_semantics = [], scalar_prefetch = 0 : i64, scratch_operands = 2 : i64, tpu.core_type = #tpu.core_type<tc>} {
    %c0 = arith.constant 0 : index
    %c0_0 = arith.constant 0 : index
    %0 = vector.load %arg3[%c0, %c0_0] : memref<1x128xf32, #tpu.memory_space<vmem>>, vector<1x128xf32>
    %1 = vector.shape_cast %0 : vector<1x128xf32> to vector<1x1x128xf32>
    %c0_1 = arith.constant 0 : index
    %c0_2 = arith.constant 0 : index
    %2 = vector.load %arg5[%c0_1, %c0_2] : memref<1x128xf32, #tpu.memory_space<vmem>>, vector<1x128xf32>
    %3 = vector.shape_cast %2 : vector<1x128xf32> to vector<1x1x128xf32>
    %c0_3 = arith.constant 0 : index
    %c0_4 = arith.constant 0 : index
    %c0_5 = arith.constant 0 : index
    %4 = vector.load %arg0[%c0_3, %c0_4, %c0_5] : memref<8x8x1xf32, #tpu.memory_space<vmem>>, vector<8x8x1xf32>
    %5 = vector.broadcast %4 : vector<8x8x1xf32> to vector<8x8x128xf32>
    %6 = vector.broadcast %1 : vector<1x1x128xf32> to vector<8x8x128xf32>
    %7 = arith.mulf %5, %6 : vector<8x8x128xf32>
    %8 = vector.broadcast %3 : vector<1x1x128xf32> to vector<8x8x128xf32>
    %9 = arith.addf %7, %8 : vector<8x8x128xf32>
    %c0_6 = arith.constant 0 : index
    %c0_7 = arith.constant 0 : index
    %c0_8 = arith.constant 0 : index
    %10 = vector.load %arg11[%c0_6, %c0_7, %c0_8] : memref<8x8x128xf32, #tpu.memory_space<vmem>>, vector<8x8x128xf32>
    tpu.vector_store %arg11[%c0_6, %c0_7, %c0_8], %9 {strides = array<i32>} : memref<8x8x128xf32, #tpu.memory_space<vmem>>, vector<8x8x128xf32>,
    %c0_9 = arith.constant 0 : index
    %c0_10 = arith.constant 0 : index
    %11 = vector.load %arg4[%c0_9, %c0_10] : memref<32x128xf32, #tpu.memory_space<vmem>>, vector<32x128xf32>
    %c0_11 = arith.constant 0 : index
    %c0_12 = arith.constant 0 : index
    %12 = vector.load %arg1[%c0_11, %c0_12] : memref<8x32xf32, #tpu.memory_space<vmem>>, vector<8x32xf32>
    %c0_13 = arith.constant 0 : index
    %c0_14 = arith.constant 0 : index
    %13 = vector.load %arg2[%c0_13, %c0_14] : memref<8x32xf32, #tpu.memory_space<vmem>>, vector<8x32xf32>
    %c0_i32 = arith.constant 0 : i32
    %14 = arith.index_cast %c0_i32 : i32 to index
    %c0_15 = arith.constant 0 : index
    %c0_16 = arith.constant 0 : index
    %15 = vector.load %arg11[%14, %c0_15, %c0_16] : memref<8x8x128xf32, #tpu.memory_space<vmem>>, vector<1x8x128xf32>
    %16 = vector.shape_cast %15 : vector<1x8x128xf32> to vector<8x128xf32>
    %cst = arith.constant dense<0.000000e+00> : vector<8x128xf32>
    %17 = tpu.matmul %12, %11, %cst {dimension_numbers = #tpu.dot_dimension_numbers<[1], [0], [0], [1], [0, 0, 1, 1], [], []>} : vector<8x32xf32>, vector<32x128xf32>, vector<8x128xf32> -> vector<8x128xf32>
    %18 = arith.addf %16, %17 : vector<8x128xf32>
    %19 = arith.negf %18 : vector<8x128xf32>
    %20 = math.exp %19 : vector<8x128xf32>
    %cst_17 = arith.constant 1.000000e+00 : f32
    %21 = vector.broadcast %cst_17 : f32 to vector<8x128xf32>
    %22 = arith.addf %21, %20 : vector<8x128xf32>
    %23 = arith.divf %21, %22 : vector<8x128xf32>
    %24 = vector.extract_strided_slice %23 {offsets = [0, 0], sizes = [8, 32], strides = [1, 1]} : vector<8x128xf32> to vector<8x32xf32>
    %25 = vector.extract_strided_slice %23 {offsets = [0, 32], sizes = [8, 32], strides = [1, 1]} : vector<8x128xf32> to vector<8x32xf32>
    %26 = vector.extract_strided_slice %23 {offsets = [0, 64], sizes = [8, 32], strides = [1, 1]} : vector<8x128xf32> to vector<8x32xf32>
    %cst_18 = arith.constant 2.000000e+00 : f32
    %27 = vector.broadcast %cst_18 : f32 to vector<8x32xf32>
    %28 = arith.mulf %27, %26 : vector<8x32xf32>
    %cst_19 = arith.constant 1.000000e+00 : f32
    %29 = vector.broadcast %cst_19 : f32 to vector<8x32xf32>
    %30 = arith.subf %28, %29 : vector<8x32xf32>
    %31 = vector.extract_strided_slice %23 {offsets = [0, 96], sizes = [8, 32], strides = [1, 1]} : vector<8x128xf32> to vector<8x32xf32>
    %32 = arith.mulf %25, %13 : vector<8x32xf32>
    %33 = arith.mulf %24, %30 : vector<8x32xf32>
    %34 = arith.addf %32, %33 : vector<8x32xf32>
    %35 = math.tanh %34 : vector<8x32xf32>
    %36 = arith.mulf %31, %35 : vector<8x32xf32>
    %37 = arith.index_cast %c0_i32 : i32 to index
    %c0_20 = arith.constant 0 : index
    %c0_21 = arith.constant 0 : index
    %38 = vector.load %arg12[%37, %c0_20, %c0_21] : memref<8x8x32xf32, #tpu.memory_space<vmem>>, vector<1x8x32xf32>
    %39 = vector.shape_cast %38 : vector<1x8x32xf32> to vector<8x32xf32>
    %40 = vector.shape_cast %36 : vector<8x32xf32> to vector<1x8x32xf32>
    tpu.vector_store %arg12[%37, %c0_20, %c0_21], %40 {strides = array<i32>} : memref<8x8x32xf32, #tpu.memory_space<vmem>>, vector<1x8x32xf32>,
    %c1_i32 = arith.constant 1 : i32
    %41 = arith.index_cast %c1_i32 : i32 to index
    %c0_22 = arith.constant 0 : index
    %c0_23 = arith.constant 0 : index
    %42 = vector.load %arg11[%41, %c0_22, %c0_23] : memref<8x8x128xf32, #tpu.memory_space<vmem>>, vector<1x8x128xf32>
    %43 = vector.shape_cast %42 : vector<1x8x128xf32> to vector<8x128xf32>
    %cst_24 = arith.constant dense<0.000000e+00> : vector<8x128xf32>
    %44 = tpu.matmul %36, %11, %cst_24 {dimension_numbers = #tpu.dot_dimension_numbers<[1], [0], [0], [1], [0, 0, 1, 1], [], []>} : vector<8x32xf32>, vector<32x128xf32>, vector<8x128xf32> -> vector<8x128xf32>
    %45 = arith.addf %43, %44 : vector<8x128xf32>
    %46 = arith.negf %45 : vector<8x128xf32>
    %47 = math.exp %46 : vector<8x128xf32>
    %cst_25 = arith.constant 1.000000e+00 : f32
    %48 = vector.broadcast %cst_25 : f32 to vector<8x128xf32>
    %49 = arith.addf %48, %47 : vector<8x128xf32>
    %50 = arith.divf %48, %49 : vector<8x128xf32>
    %51 = vector.extract_strided_slice %50 {offsets = [0, 0], sizes = [8, 32], strides = [1, 1]} : vector<8x128xf32> to vector<8x32xf32>
    %52 = vector.extract_strided_slice %50 {offsets = [0, 32], sizes = [8, 32], strides = [1, 1]} : vector<8x128xf32> to vector<8x32xf32>
    %53 = vector.extract_strided_slice %50 {offsets = [0, 64], sizes = [8, 32], strides = [1, 1]} : vector<8x128xf32> to vector<8x32xf32>
    %cst_26 = arith.constant 2.000000e+00 : f32
    %54 = vector.broadcast %cst_26 : f32 to vector<8x32xf32>
    %55 = arith.mulf %54, %53 : vector<8x32xf32>
    %cst_27 = arith.constant 1.000000e+00 : f32
    %56 = vector.broadcast %cst_27 : f32 to vector<8x32xf32>
    %57 = arith.subf %55, %56 : vector<8x32xf32>
    %58 = vector.extract_strided_slice %50 {offsets = [0, 96], sizes = [8, 32], strides = [1, 1]} : vector<8x128xf32> to vector<8x32xf32>
    %59 = arith.mulf %52, %34 : vector<8x32xf32>
    %60 = arith.mulf %51, %57 : vector<8x32xf32>
    %61 = arith.addf %59, %60 : vector<8x32xf32>
    %62 = math.tanh %61 : vector<8x32xf32>
    %63 = arith.mulf %58, %62 : vector<8x32xf32>
    %64 = arith.index_cast %c1_i32 : i32 to index
    %c0_28 = arith.constant 0 : index
    %c0_29 = arith.constant 0 : index
    %65 = vector.load %arg12[%64, %c0_28, %c0_29] : memref<8x8x32xf32, #tpu.memory_space<vmem>>, vector<1x8x32xf32>
    %66 = vector.shape_cast %65 : vector<1x8x32xf32> to vector<8x32xf32>
    %67 = vector.shape_cast %63 : vector<8x32xf32> to vector<1x8x32xf32>
    tpu.vector_store %arg12[%64, %c0_28, %c0_29], %67 {strides = array<i32>} : memref<8x8x32xf32, #tpu.memory_space<vmem>>, vector<1x8x32xf32>,
    %c2_i32 = arith.constant 2 : i32
    %68 = arith.index_cast %c2_i32 : i32 to index
    %c0_30 = arith.constant 0 : index
    %c0_31 = arith.constant 0 : index
    %69 = vector.load %arg11[%68, %c0_30, %c0_31] : memref<8x8x128xf32, #tpu.memory_space<vmem>>, vector<1x8x128xf32>
    %70 = vector.shape_cast %69 : vector<1x8x128xf32> to vector<8x128xf32>
    %cst_32 = arith.constant dense<0.000000e+00> : vector<8x128xf32>
    %71 = tpu.matmul %63, %11, %cst_32 {dimension_numbers = #tpu.dot_dimension_numbers<[1], [0], [0], [1], [0, 0, 1, 1], [], []>} : vector<8x32xf32>, vector<32x128xf32>, vector<8x128xf32> -> vector<8x128xf32>
    %72 = arith.addf %70, %71 : vector<8x128xf32>
    %73 = arith.negf %72 : vector<8x128xf32>
    %74 = math.exp %73 : vector<8x128xf32>
    %cst_33 = arith.constant 1.000000e+00 : f32
    %75 = vector.broadcast %cst_33 : f32 to vector<8x128xf32>
    %76 = arith.addf %75, %74 : vector<8x128xf32>
    %77 = arith.divf %75, %76 : vector<8x128xf32>
    %78 = vector.extract_strided_slice %77 {offsets = [0, 0], sizes = [8, 32], strides = [1, 1]} : vector<8x128xf32> to vector<8x32xf32>
    %79 = vector.extract_strided_slice %77 {offsets = [0, 32], sizes = [8, 32], strides = [1, 1]} : vector<8x128xf32> to vector<8x32xf32>
    %80 = vector.extract_strided_slice %77 {offsets = [0, 64], sizes = [8, 32], strides = [1, 1]} : vector<8x128xf32> to vector<8x32xf32>
    %cst_34 = arith.constant 2.000000e+00 : f32
    %81 = vector.broadcast %cst_34 : f32 to vector<8x32xf32>
    %82 = arith.mulf %81, %80 : vector<8x32xf32>
    %cst_35 = arith.constant 1.000000e+00 : f32
    %83 = vector.broadcast %cst_35 : f32 to vector<8x32xf32>
    %84 = arith.subf %82, %83 : vector<8x32xf32>
    %85 = vector.extract_strided_slice %77 {offsets = [0, 96], sizes = [8, 32], strides = [1, 1]} : vector<8x128xf32> to vector<8x32xf32>
    %86 = arith.mulf %79, %61 : vector<8x32xf32>
    %87 = arith.mulf %78, %84 : vector<8x32xf32>
    %88 = arith.addf %86, %87 : vector<8x32xf32>
    %89 = math.tanh %88 : vector<8x32xf32>
    %90 = arith.mulf %85, %89 : vector<8x32xf32>
    %91 = arith.index_cast %c2_i32 : i32 to index
    %c0_36 = arith.constant 0 : index
    %c0_37 = arith.constant 0 : index
    %92 = vector.load %arg12[%91, %c0_36, %c0_37] : memref<8x8x32xf32, #tpu.memory_space<vmem>>, vector<1x8x32xf32>
    %93 = vector.shape_cast %92 : vector<1x8x32xf32> to vector<8x32xf32>
    %94 = vector.shape_cast %90 : vector<8x32xf32> to vector<1x8x32xf32>
    tpu.vector_store %arg12[%91, %c0_36, %c0_37], %94 {strides = array<i32>} : memref<8x8x32xf32, #tpu.memory_space<vmem>>, vector<1x8x32xf32>,
    %c3_i32 = arith.constant 3 : i32
    %95 = arith.index_cast %c3_i32 : i32 to index
    %c0_38 = arith.constant 0 : index
    %c0_39 = arith.constant 0 : index
    %96 = vector.load %arg11[%95, %c0_38, %c0_39] : memref<8x8x128xf32, #tpu.memory_space<vmem>>, vector<1x8x128xf32>
    %97 = vector.shape_cast %96 : vector<1x8x128xf32> to vector<8x128xf32>
    %cst_40 = arith.constant dense<0.000000e+00> : vector<8x128xf32>
    %98 = tpu.matmul %90, %11, %cst_40 {dimension_numbers = #tpu.dot_dimension_numbers<[1], [0], [0], [1], [0, 0, 1, 1], [], []>} : vector<8x32xf32>, vector<32x128xf32>, vector<8x128xf32> -> vector<8x128xf32>
    %99 = arith.addf %97, %98 : vector<8x128xf32>
    %100 = arith.negf %99 : vector<8x128xf32>
    %101 = math.exp %100 : vector<8x128xf32>
    %cst_41 = arith.constant 1.000000e+00 : f32
    %102 = vector.broadcast %cst_41 : f32 to vector<8x128xf32>
    %103 = arith.addf %102, %101 : vector<8x128xf32>
    %104 = arith.divf %102, %103 : vector<8x128xf32>
    %105 = vector.extract_strided_slice %104 {offsets = [0, 0], sizes = [8, 32], strides = [1, 1]} : vector<8x128xf32> to vector<8x32xf32>
    %106 = vector.extract_strided_slice %104 {offsets = [0, 32], sizes = [8, 32], strides = [1, 1]} : vector<8x128xf32> to vector<8x32xf32>
    %107 = vector.extract_strided_slice %104 {offsets = [0, 64], sizes = [8, 32], strides = [1, 1]} : vector<8x128xf32> to vector<8x32xf32>
    %cst_42 = arith.constant 2.000000e+00 : f32
    %108 = vector.broadcast %cst_42 : f32 to vector<8x32xf32>
    %109 = arith.mulf %108, %107 : vector<8x32xf32>
    %cst_43 = arith.constant 1.000000e+00 : f32
    %110 = vector.broadcast %cst_43 : f32 to vector<8x32xf32>
    %111 = arith.subf %109, %110 : vector<8x32xf32>
    %112 = vector.extract_strided_slice %104 {offsets = [0, 96], sizes = [8, 32], strides = [1, 1]} : vector<8x128xf32> to vector<8x32xf32>
    %113 = arith.mulf %106, %88 : vector<8x32xf32>
    %114 = arith.mulf %105, %111 : vector<8x32xf32>
    %115 = arith.addf %113, %114 : vector<8x32xf32>
    %116 = math.tanh %115 : vector<8x32xf32>
    %117 = arith.mulf %112, %116 : vector<8x32xf32>
    %118 = arith.index_cast %c3_i32 : i32 to index
    %c0_44 = arith.constant 0 : index
    %c0_45 = arith.constant 0 : index
    %119 = vector.load %arg12[%118, %c0_44, %c0_45] : memref<8x8x32xf32, #tpu.memory_space<vmem>>, vector<1x8x32xf32>
    %120 = vector.shape_cast %119 : vector<1x8x32xf32> to vector<8x32xf32>
    %121 = vector.shape_cast %117 : vector<8x32xf32> to vector<1x8x32xf32>
    tpu.vector_store %arg12[%118, %c0_44, %c0_45], %121 {strides = array<i32>} : memref<8x8x32xf32, #tpu.memory_space<vmem>>, vector<1x8x32xf32>,
    %c4_i32 = arith.constant 4 : i32
    %122 = arith.index_cast %c4_i32 : i32 to index
    %c0_46 = arith.constant 0 : index
    %c0_47 = arith.constant 0 : index
    %123 = vector.load %arg11[%122, %c0_46, %c0_47] : memref<8x8x128xf32, #tpu.memory_space<vmem>>, vector<1x8x128xf32>
    %124 = vector.shape_cast %123 : vector<1x8x128xf32> to vector<8x128xf32>
    %cst_48 = arith.constant dense<0.000000e+00> : vector<8x128xf32>
    %125 = tpu.matmul %117, %11, %cst_48 {dimension_numbers = #tpu.dot_dimension_numbers<[1], [0], [0], [1], [0, 0, 1, 1], [], []>} : vector<8x32xf32>, vector<32x128xf32>, vector<8x128xf32> -> vector<8x128xf32>
    %126 = arith.addf %124, %125 : vector<8x128xf32>
    %127 = arith.negf %126 : vector<8x128xf32>
    %128 = math.exp %127 : vector<8x128xf32>
    %cst_49 = arith.constant 1.000000e+00 : f32
    %129 = vector.broadcast %cst_49 : f32 to vector<8x128xf32>
    %130 = arith.addf %129, %128 : vector<8x128xf32>
    %131 = arith.divf %129, %130 : vector<8x128xf32>
    %132 = vector.extract_strided_slice %131 {offsets = [0, 0], sizes = [8, 32], strides = [1, 1]} : vector<8x128xf32> to vector<8x32xf32>
    %133 = vector.extract_strided_slice %131 {offsets = [0, 32], sizes = [8, 32], strides = [1, 1]} : vector<8x128xf32> to vector<8x32xf32>
    %134 = vector.extract_strided_slice %131 {offsets = [0, 64], sizes = [8, 32], strides = [1, 1]} : vector<8x128xf32> to vector<8x32xf32>
    %cst_50 = arith.constant 2.000000e+00 : f32
    %135 = vector.broadcast %cst_50 : f32 to vector<8x32xf32>
    %136 = arith.mulf %135, %134 : vector<8x32xf32>
    %cst_51 = arith.constant 1.000000e+00 : f32
    %137 = vector.broadcast %cst_51 : f32 to vector<8x32xf32>
    %138 = arith.subf %136, %137 : vector<8x32xf32>
    %139 = vector.extract_strided_slice %131 {offsets = [0, 96], sizes = [8, 32], strides = [1, 1]} : vector<8x128xf32> to vector<8x32xf32>
    %140 = arith.mulf %133, %115 : vector<8x32xf32>
    %141 = arith.mulf %132, %138 : vector<8x32xf32>
    %142 = arith.addf %140, %141 : vector<8x32xf32>
    %143 = math.tanh %142 : vector<8x32xf32>
    %144 = arith.mulf %139, %143 : vector<8x32xf32>
    %145 = arith.index_cast %c4_i32 : i32 to index
    %c0_52 = arith.constant 0 : index
    %c0_53 = arith.constant 0 : index
    %146 = vector.load %arg12[%145, %c0_52, %c0_53] : memref<8x8x32xf32, #tpu.memory_space<vmem>>, vector<1x8x32xf32>
    %147 = vector.shape_cast %146 : vector<1x8x32xf32> to vector<8x32xf32>
    %148 = vector.shape_cast %144 : vector<8x32xf32> to vector<1x8x32xf32>
    tpu.vector_store %arg12[%145, %c0_52, %c0_53], %148 {strides = array<i32>} : memref<8x8x32xf32, #tpu.memory_space<vmem>>, vector<1x8x32xf32>,
    %c5_i32 = arith.constant 5 : i32
    %149 = arith.index_cast %c5_i32 : i32 to index
    %c0_54 = arith.constant 0 : index
    %c0_55 = arith.constant 0 : index
    %150 = vector.load %arg11[%149, %c0_54, %c0_55] : memref<8x8x128xf32, #tpu.memory_space<vmem>>, vector<1x8x128xf32>
    %151 = vector.shape_cast %150 : vector<1x8x128xf32> to vector<8x128xf32>
    %cst_56 = arith.constant dense<0.000000e+00> : vector<8x128xf32>
    %152 = tpu.matmul %144, %11, %cst_56 {dimension_numbers = #tpu.dot_dimension_numbers<[1], [0], [0], [1], [0, 0, 1, 1], [], []>} : vector<8x32xf32>, vector<32x128xf32>, vector<8x128xf32> -> vector<8x128xf32>
    %153 = arith.addf %151, %152 : vector<8x128xf32>
    %154 = arith.negf %153 : vector<8x128xf32>
    %155 = math.exp %154 : vector<8x128xf32>
    %cst_57 = arith.constant 1.000000e+00 : f32
    %156 = vector.broadcast %cst_57 : f32 to vector<8x128xf32>
    %157 = arith.addf %156, %155 : vector<8x128xf32>
    %158 = arith.divf %156, %157 : vector<8x128xf32>
    %159 = vector.extract_strided_slice %158 {offsets = [0, 0], sizes = [8, 32], strides = [1, 1]} : vector<8x128xf32> to vector<8x32xf32>
    %160 = vector.extract_strided_slice %158 {offsets = [0, 32], sizes = [8, 32], strides = [1, 1]} : vector<8x128xf32> to vector<8x32xf32>
    %161 = vector.extract_strided_slice %158 {offsets = [0, 64], sizes = [8, 32], strides = [1, 1]} : vector<8x128xf32> to vector<8x32xf32>
    %cst_58 = arith.constant 2.000000e+00 : f32
    %162 = vector.broadcast %cst_58 : f32 to vector<8x32xf32>
    %163 = arith.mulf %162, %161 : vector<8x32xf32>
    %cst_59 = arith.constant 1.000000e+00 : f32
    %164 = vector.broadcast %cst_59 : f32 to vector<8x32xf32>
    %165 = arith.subf %163, %164 : vector<8x32xf32>
    %166 = vector.extract_strided_slice %158 {offsets = [0, 96], sizes = [8, 32], strides = [1, 1]} : vector<8x128xf32> to vector<8x32xf32>
    %167 = arith.mulf %160, %142 : vector<8x32xf32>
    %168 = arith.mulf %159, %165 : vector<8x32xf32>
    %169 = arith.addf %167, %168 : vector<8x32xf32>
    %170 = math.tanh %169 : vector<8x32xf32>
    %171 = arith.mulf %166, %170 : vector<8x32xf32>
    %172 = arith.index_cast %c5_i32 : i32 to index
    %c0_60 = arith.constant 0 : index
    %c0_61 = arith.constant 0 : index
    %173 = vector.load %arg12[%172, %c0_60, %c0_61] : memref<8x8x32xf32, #tpu.memory_space<vmem>>, vector<1x8x32xf32>
    %174 = vector.shape_cast %173 : vector<1x8x32xf32> to vector<8x32xf32>
    %175 = vector.shape_cast %171 : vector<8x32xf32> to vector<1x8x32xf32>
    tpu.vector_store %arg12[%172, %c0_60, %c0_61], %175 {strides = array<i32>} : memref<8x8x32xf32, #tpu.memory_space<vmem>>, vector<1x8x32xf32>,
    %c6_i32 = arith.constant 6 : i32
    %176 = arith.index_cast %c6_i32 : i32 to index
    %c0_62 = arith.constant 0 : index
    %c0_63 = arith.constant 0 : index
    %177 = vector.load %arg11[%176, %c0_62, %c0_63] : memref<8x8x128xf32, #tpu.memory_space<vmem>>, vector<1x8x128xf32>
    %178 = vector.shape_cast %177 : vector<1x8x128xf32> to vector<8x128xf32>
    %cst_64 = arith.constant dense<0.000000e+00> : vector<8x128xf32>
    %179 = tpu.matmul %171, %11, %cst_64 {dimension_numbers = #tpu.dot_dimension_numbers<[1], [0], [0], [1], [0, 0, 1, 1], [], []>} : vector<8x32xf32>, vector<32x128xf32>, vector<8x128xf32> -> vector<8x128xf32>
    %180 = arith.addf %178, %179 : vector<8x128xf32>
    %181 = arith.negf %180 : vector<8x128xf32>
    %182 = math.exp %181 : vector<8x128xf32>
    %cst_65 = arith.constant 1.000000e+00 : f32
    %183 = vector.broadcast %cst_65 : f32 to vector<8x128xf32>
    %184 = arith.addf %183, %182 : vector<8x128xf32>
    %185 = arith.divf %183, %184 : vector<8x128xf32>
    %186 = vector.extract_strided_slice %185 {offsets = [0, 0], sizes = [8, 32], strides = [1, 1]} : vector<8x128xf32> to vector<8x32xf32>
    %187 = vector.extract_strided_slice %185 {offsets = [0, 32], sizes = [8, 32], strides = [1, 1]} : vector<8x128xf32> to vector<8x32xf32>
    %188 = vector.extract_strided_slice %185 {offsets = [0, 64], sizes = [8, 32], strides = [1, 1]} : vector<8x128xf32> to vector<8x32xf32>
    %cst_66 = arith.constant 2.000000e+00 : f32
    %189 = vector.broadcast %cst_66 : f32 to vector<8x32xf32>
    %190 = arith.mulf %189, %188 : vector<8x32xf32>
    %cst_67 = arith.constant 1.000000e+00 : f32
    %191 = vector.broadcast %cst_67 : f32 to vector<8x32xf32>
    %192 = arith.subf %190, %191 : vector<8x32xf32>
    %193 = vector.extract_strided_slice %185 {offsets = [0, 96], sizes = [8, 32], strides = [1, 1]} : vector<8x128xf32> to vector<8x32xf32>
    %194 = arith.mulf %187, %169 : vector<8x32xf32>
    %195 = arith.mulf %186, %192 : vector<8x32xf32>
    %196 = arith.addf %194, %195 : vector<8x32xf32>
    %197 = math.tanh %196 : vector<8x32xf32>
    %198 = arith.mulf %193, %197 : vector<8x32xf32>
    %199 = arith.index_cast %c6_i32 : i32 to index
    %c0_68 = arith.constant 0 : index
    %c0_69 = arith.constant 0 : index
    %200 = vector.load %arg12[%199, %c0_68, %c0_69] : memref<8x8x32xf32, #tpu.memory_space<vmem>>, vector<1x8x32xf32>
    %201 = vector.shape_cast %200 : vector<1x8x32xf32> to vector<8x32xf32>
    %202 = vector.shape_cast %198 : vector<8x32xf32> to vector<1x8x32xf32>
    tpu.vector_store %arg12[%199, %c0_68, %c0_69], %202 {strides = array<i32>} : memref<8x8x32xf32, #tpu.memory_space<vmem>>, vector<1x8x32xf32>,
    %c7_i32 = arith.constant 7 : i32
    %203 = arith.index_cast %c7_i32 : i32 to index
    %c0_70 = arith.constant 0 : index
    %c0_71 = arith.constant 0 : index
    %204 = vector.load %arg11[%203, %c0_70, %c0_71] : memref<8x8x128xf32, #tpu.memory_space<vmem>>, vector<1x8x128xf32>
    %205 = vector.shape_cast %204 : vector<1x8x128xf32> to vector<8x128xf32>
    %cst_72 = arith.constant dense<0.000000e+00> : vector<8x128xf32>
    %206 = tpu.matmul %198, %11, %cst_72 {dimension_numbers = #tpu.dot_dimension_numbers<[1], [0], [0], [1], [0, 0, 1, 1], [], []>} : vector<8x32xf32>, vector<32x128xf32>, vector<8x128xf32> -> vector<8x128xf32>
    %207 = arith.addf %205, %206 : vector<8x128xf32>
    %208 = arith.negf %207 : vector<8x128xf32>
    %209 = math.exp %208 : vector<8x128xf32>
    %cst_73 = arith.constant 1.000000e+00 : f32
    %210 = vector.broadcast %cst_73 : f32 to vector<8x128xf32>
    %211 = arith.addf %210, %209 : vector<8x128xf32>
    %212 = arith.divf %210, %211 : vector<8x128xf32>
    %213 = vector.extract_strided_slice %212 {offsets = [0, 0], sizes = [8, 32], strides = [1, 1]} : vector<8x128xf32> to vector<8x32xf32>
    %214 = vector.extract_strided_slice %212 {offsets = [0, 32], sizes = [8, 32], strides = [1, 1]} : vector<8x128xf32> to vector<8x32xf32>
    %215 = vector.extract_strided_slice %212 {offsets = [0, 64], sizes = [8, 32], strides = [1, 1]} : vector<8x128xf32> to vector<8x32xf32>
    %cst_74 = arith.constant 2.000000e+00 : f32
    %216 = vector.broadcast %cst_74 : f32 to vector<8x32xf32>
    %217 = arith.mulf %216, %215 : vector<8x32xf32>
    %cst_75 = arith.constant 1.000000e+00 : f32
    %218 = vector.broadcast %cst_75 : f32 to vector<8x32xf32>
    %219 = arith.subf %217, %218 : vector<8x32xf32>
    %220 = vector.extract_strided_slice %212 {offsets = [0, 96], sizes = [8, 32], strides = [1, 1]} : vector<8x128xf32> to vector<8x32xf32>
    %221 = arith.mulf %214, %196 : vector<8x32xf32>
    %222 = arith.mulf %213, %219 : vector<8x32xf32>
    %223 = arith.addf %221, %222 : vector<8x32xf32>
    %224 = math.tanh %223 : vector<8x32xf32>
    %225 = arith.mulf %220, %224 : vector<8x32xf32>
    %226 = arith.index_cast %c7_i32 : i32 to index
    %c0_76 = arith.constant 0 : index
    %c0_77 = arith.constant 0 : index
    %227 = vector.load %arg12[%226, %c0_76, %c0_77] : memref<8x8x32xf32, #tpu.memory_space<vmem>>, vector<1x8x32xf32>
    %228 = vector.shape_cast %227 : vector<1x8x32xf32> to vector<8x32xf32>
    %229 = vector.shape_cast %225 : vector<8x32xf32> to vector<1x8x32xf32>
    tpu.vector_store %arg12[%226, %c0_76, %c0_77], %229 {strides = array<i32>} : memref<8x8x32xf32, #tpu.memory_space<vmem>>, vector<1x8x32xf32>,
    %c8_i32 = arith.constant 8 : i32
    %c0_78 = arith.constant 0 : index
    %c0_79 = arith.constant 0 : index
    %230 = vector.load %arg9[%c0_78, %c0_79] : memref<8x32xf32, #tpu.memory_space<vmem>>, vector<8x32xf32>
    tpu.vector_store %arg9[%c0_78, %c0_79], %225 {strides = array<i32>} : memref<8x32xf32, #tpu.memory_space<vmem>>, vector<8x32xf32>,
    %c0_80 = arith.constant 0 : index
    %c0_81 = arith.constant 0 : index
    %231 = vector.load %arg10[%c0_80, %c0_81] : memref<8x32xf32, #tpu.memory_space<vmem>>, vector<8x32xf32>
    tpu.vector_store %arg10[%c0_80, %c0_81], %223 {strides = array<i32>} : memref<8x32xf32, #tpu.memory_space<vmem>>, vector<8x32xf32>,
    %c0_82 = arith.constant 0 : index
    %c0_83 = arith.constant 0 : index
    %232 = vector.load %arg6[%c0_82, %c0_83] : memref<1x32xf32, #tpu.memory_space<vmem>>, vector<1x32xf32>
    %233 = vector.shape_cast %232 : vector<1x32xf32> to vector<1x1x32xf32>
    %c0_84 = arith.constant 0 : index
    %c0_85 = arith.constant 0 : index
    %c0_86 = arith.constant 0 : index
    %234 = vector.load %arg12[%c0_84, %c0_85, %c0_86] : memref<8x8x32xf32, #tpu.memory_space<vmem>>, vector<8x8x32xf32>
    %235 = vector.broadcast %233 : vector<1x1x32xf32> to vector<8x8x32xf32>
    %236 = arith.mulf %234, %235 : vector<8x8x32xf32>
    %cst_87 = arith.constant dense<0.000000e+00> : vector<8x8xf32>
    %237 = vector.multi_reduction <add>, %236, %cst_87 [2] : vector<8x8x32xf32> to vector<8x8xf32>
    %c0_88 = arith.constant 0 : index
    %238 = memref.load %arg7[%c0_88] : memref<1xf32, #tpu.memory_space<smem>>
    %239 = vector.broadcast %238 : f32 to vector<8x8xf32>
    %240 = arith.addf %237, %239 : vector<8x8xf32>
    %c0_89 = arith.constant 0 : index
    %c0_90 = arith.constant 0 : index
    %241 = vector.load %arg8[%c0_89, %c0_90] : memref<8x8xf32, #tpu.memory_space<vmem>>, vector<8x8xf32>
    tpu.vector_store %arg8[%c0_89, %c0_90], %240 {strides = array<i32>} : memref<8x8xf32, #tpu.memory_space<vmem>>, vector<8x8xf32>,
    return
  }
}

</mosaic_0001>

<llo_original>
// kernel: rnn_forward.1
$region0: #{rnn_forward.1}
  #allocation0 [shape = 'u32[]', space=smem, size = 0x4, offset = 0x4, fixed_abs, tag = 'smem constant byte address 0x4 - core index']
  #allocation1 [shape = 'u32[144,128]{1,0:T(1,128)}', space=vmem, size = 0x12000, scoped, tag = 'internal scratch']
  #allocation2 [shape = 'f32[8,8,128]{2,1,0:T(8,128)}', space=vmem, size = 0x8000, scoped, tag = 'scratch operand']
  #allocation3 [shape = 'f32[8,8,32]{2,1,0:T(8,128)}', space=vmem, size = 0x8000, scoped, tag = 'scratch operand']
  #allocation4 [shape = 'f32[1]{0:T(128)S(6)}', space=smem, size = 0x200, scoped, tag = 'scoped memory for rnn_forward.1']
  %s0 = inlined_call_operand.vmem [shape: f32[8,8,1], index: 0, kind: input, shape index: {}]
  %s1 = inlined_call_operand.vmem [shape: f32[8,32], index: 1, kind: input, shape index: {}]
  %s2 = inlined_call_operand.vmem [shape: f32[8,32], index: 2, kind: input, shape index: {}]
  %s3 = inlined_call_operand.vmem [shape: f32[1,128], index: 3, kind: input, shape index: {}]
  %s4 = inlined_call_operand.vmem [shape: f32[32,128], index: 4, kind: input, shape index: {}]
  %s5 = inlined_call_operand.vmem [shape: f32[1,128], index: 5, kind: input, shape index: {}]
  %s6 = inlined_call_operand.vmem [shape: f32[1,32], index: 6, kind: input, shape index: {}]
  %s7 = inlined_call_operand.<no memory space> [shape: f32[1], index: 7, kind: input, shape index: {}]
  %s8 = inlined_call_operand.vmem [shape: f32[8,8], index: 8, kind: output, shape index: {0}]
  %s9 = inlined_call_operand.vmem [shape: f32[8,32], index: 9, kind: output, shape index: {1}]
  %s10 = inlined_call_operand.vmem [shape: f32[8,32], index: 10, kind: output, shape index: {2}]
  %11 = xla_tuple %s8, %s9, %s10
  %s12 = sld [smem:[#allocation0]]
  $region58: #{rnn_forward.1} parent=0
    _
  %s14 = ssub.s32 1, %s12
  %s15 = scalar_select 0, %s14, %s12
  %16 = sst [smem:[#allocation4]] %s7
  // Predicated region
  $region2: #{rnn_forward.1} parent=0 // pred_check
    _
  $region3: #{rnn_forward.1} parent=0 // pred_check_branch
    %18 = sbr.rel (0) target = $region5
  $region4: #{rnn_forward.1} parent=0 // pred_region
    _
  $region5: #{rnn_forward.1} parent=0 // pred_fallthru
    _
  // Predicated region
  $region6: #{rnn_forward.1} parent=0 // pred_check
    _
  $region7: #{rnn_forward.1} parent=0 // pred_check_branch
    %20 = sbr.rel (0) target = $region9
  $region8: #{rnn_forward.1} parent=0 // pred_region
    _
  $region9: #{rnn_forward.1} parent=0 // pred_fallthru
    _
  // Predicated region
  $region10: #{rnn_forward.1} parent=0 // pred_check
    _
  $region11: #{rnn_forward.1} parent=0 // pred_check_branch
    %22 = sbr.rel (0) target = $region13
  $region12: #{rnn_forward.1} parent=0 // pred_region
    _
  $region13: #{rnn_forward.1} parent=0 // pred_fallthru
    _
  // Predicated region
  $region14: #{rnn_forward.1} parent=0 // pred_check
    _
  $region15: #{rnn_forward.1} parent=0 // pred_check_branch
    %24 = sbr.rel (0) target = $region17
  $region16: #{rnn_forward.1} parent=0 // pred_region
    _
  $region17: #{rnn_forward.1} parent=0 // pred_fallthru
    _
  // Predicated region
  $region18: #{rnn_forward.1} parent=0 // pred_check
    _
  $region19: #{rnn_forward.1} parent=0 // pred_check_branch
    %26 = sbr.rel (0) target = $region21
  $region20: #{rnn_forward.1} parent=0 // pred_region
    _
  $region21: #{rnn_forward.1} parent=0 // pred_fallthru
    _
  // Predicated region
  $region22: #{rnn_forward.1} parent=0 // pred_check
    _
  $region23: #{rnn_forward.1} parent=0 // pred_check_branch
    %28 = sbr.rel (0) target = $region25
  $region24: #{rnn_forward.1} parent=0 // pred_region
    _
  $region25: #{rnn_forward.1} parent=0 // pred_fallthru
    _
  // Predicated region
  $region26: #{rnn_forward.1} parent=0 // pred_check
    _
  $region27: #{rnn_forward.1} parent=0 // pred_check_branch
    %30 = sbr.rel (0) target = $region29
  $region28: #{rnn_forward.1} parent=0 // pred_region
    _
  $region29: #{rnn_forward.1} parent=0 // pred_fallthru
    _
  // Predicated region
  $region30: #{rnn_forward.1} parent=0 // pred_check
    _
  $region31: #{rnn_forward.1} parent=0 // pred_check_branch
    %32 = sbr.rel (0) target = $region33
  $region32: #{rnn_forward.1} parent=0 // pred_region
    _
  $region33: #{rnn_forward.1} parent=0 // pred_fallthru
    _
  %v33 = vld [vmem:[%s3] sm:$0x1]
  %v34 = vld [vmem:[%s5] sm:$0x1]
  %v35 = vld [vmem:[%s0] sm:$0xff]
  %v36 = vld [vmem:[%s0 + $0x8] sm:$0xff]
  %v37 = vld [vmem:[%s0 + $0x10] sm:$0xff]
  %v38 = vld [vmem:[%s0 + $0x18] sm:$0xff]
  %v39 = vld [vmem:[%s0 + $0x20] sm:$0xff]
  %v40 = vld [vmem:[%s0 + $0x28] sm:$0xff]
  %v41 = vld [vmem:[%s0 + $0x30] sm:$0xff]
  %v42 = vld [vmem:[%s0 + $0x38] sm:$0xff]
  %44 = vset.pattern.permute.xlu0 0
  %45 = vperm.xlu0 %44, %v35
  %v46 = vpop.permute.xlu0 %45
  %49 = vset.pattern.permute.xlu0 0
  %50 = vperm.xlu0 %49, %v36
  %v51 = vpop.permute.xlu0 %50
  %54 = vset.pattern.permute.xlu0 0
  %55 = vperm.xlu0 %54, %v37
  %v56 = vpop.permute.xlu0 %55
  %59 = vset.pattern.permute.xlu0 0
  %60 = vperm.xlu0 %59, %v38
  %v61 = vpop.permute.xlu0 %60
  %64 = vset.pattern.permute.xlu0 0
  %65 = vperm.xlu0 %64, %v39
  %v66 = vpop.permute.xlu0 %65
  %69 = vset.pattern.permute.xlu0 0
  %70 = vperm.xlu0 %69, %v40
  %v71 = vpop.permute.xlu0 %70
  %74 = vset.pattern.permute.xlu0 0
  %75 = vperm.xlu0 %74, %v41
  %v76 = vpop.permute.xlu0 %75
  %79 = vset.pattern.permute.xlu0 0
  %80 = vperm.xlu0 %79, %v42
  %v81 = vpop.permute.xlu0 %80
  %v84 = vlaneseq
  %v85 = vshrl.u32 %v84, 7
  %v86 = vsub.s32 0, %v85
  %v87 = vrot.slane %v33, %v86
  %v89 = vmul.f32 %v46, %v87
  %v90 = vmul.f32 %v51, %v87
  %v91 = vmul.f32 %v56, %v87
  %v92 = vmul.f32 %v61, %v87
  %v93 = vmul.f32 %v66, %v87
  %v94 = vmul.f32 %v71, %v87
  %v95 = vmul.f32 %v76, %v87
  %v96 = vmul.f32 %v81, %v87
  %v98 = vlaneseq
  %v99 = vshrl.u32 %v98, 7
  %v100 = vsub.s32 0, %v99
  %v101 = vrot.slane %v34, %v100
  %v103 = vadd.f32 %v89, %v101
  %v104 = vadd.f32 %v90, %v101
  %v105 = vadd.f32 %v91, %v101
  %v106 = vadd.f32 %v92, %v101
  %v107 = vadd.f32 %v93, %v101
  %v108 = vadd.f32 %v94, %v101
  %v109 = vadd.f32 %v95, %v101
  %v110 = vadd.f32 %v96, %v101
  %111 = vst [vmem:[#allocation2] sm:$0xff] %v103
  %112 = vst [vmem:[#allocation2 + $0x8] sm:$0xff] %v104
  %113 = vst [vmem:[#allocation2 + $0x10] sm:$0xff] %v105
  %114 = vst [vmem:[#allocation2 + $0x18] sm:$0xff] %v106
  %115 = vst [vmem:[#allocation2 + $0x20] sm:$0xff] %v107
  %116 = vst [vmem:[#allocation2 + $0x28] sm:$0xff] %v108
  %117 = vst [vmem:[#allocation2 + $0x30] sm:$0xff] %v109
  %118 = vst [vmem:[#allocation2 + $0x38] sm:$0xff] %v110
  %v119 = vld [vmem:[%s4] sm:$0xff]
  %v120 = vld [vmem:[%s4 + $0x8] sm:$0xff]
  %v121 = vld [vmem:[%s4 + $0x10] sm:$0xff]
  %v122 = vld [vmem:[%s4 + $0x18] sm:$0xff]
  %v123 = vld [vmem:[%s1] sm:$0xff]
  %v124 = vld [vmem:[%s2] sm:$0xff]
  %v125 = vld [vmem:[#allocation2] sm:$0xff]
  %vm126 = vcmask 261120
  %v128 = vsel %vm126, %v123, 0
  %130 = vmatprep.subr.mxu0 0.0
  %131 = vmatpush1.msra.mxu0 0.0
  %132 = vmatprep.subr.mxu0 0.0
  %133 = vmatpush1.msra.mxu0 0.0
  %134 = vmatprep.subr.mxu0 0.0
  %135 = vmatpush1.msra.mxu0 0.0
  %136 = vmatprep.subr.mxu0 0.0
  %137 = vmatpush1.msra.mxu0 0.0
  %138 = vmatprep.subr.mxu0 0.0
  %139 = vmatpush1.msra.mxu0 0.0
  %140 = vmatprep.subr.mxu0 0.0
  %141 = vmatpush1.msra.mxu0 0.0
  %142 = vmatprep.subr.mxu0 0.0
  %143 = vmatpush1.msra.mxu0 0.0
  %144 = vmatprep.subr.mxu0 0.0
  %145 = vmatpush1.msra.mxu0 0.0
  %146 = vmatprep.subr.mxu0 0.0
  %147 = vmatpush1.msra.mxu0 0.0
  %148 = vmatprep.subr.mxu0 0.0
  %149 = vmatpush1.msra.mxu0 0.0
  %150 = vmatprep.subr.mxu0 0.0
  %151 = vmatpush1.msra.mxu0 0.0
  %152 = vmatprep.subr.mxu0 0.0
  %153 = vmatpush1.msra.mxu0 0.0
  %154 = vmatprep.subr.mxu0 0.0
  %155 = vmatpush1.msra.mxu0 %v122
  %156 = vmatprep.subr.mxu0 0.0
  %157 = vmatpush1.msra.mxu0 %v121
  %158 = vmatprep.subr.mxu0 0.0
  %159 = vmatpush1.msra.mxu0 %v120
  %160 = vmatprep.subr.mxu0 0.0
  %161 = vmatpush1.msra.mxu0 %v119
  %162 = vmatprep.subr.mxu0 0.0
  %163 = vmatpush2.msra.mxu0 0.0
  %164 = vmatprep.subr.mxu0 0.0
  %165 = vmatpush2.msra.mxu0 0.0
  %166 = vmatprep.subr.mxu0 0.0
  %167 = vmatpush2.msra.mxu0 0.0
  %168 = vmatprep.subr.mxu0 0.0
  %169 = vmatpush2.msra.mxu0 0.0
  %170 = vmatprep.subr.mxu0 0.0
  %171 = vmatpush2.msra.mxu0 0.0
  %172 = vmatprep.subr.mxu0 0.0
  %173 = vmatpush2.msra.mxu0 0.0
  %174 = vmatprep.subr.mxu0 0.0
  %175 = vmatpush2.msra.mxu0 0.0
  %176 = vmatprep.subr.mxu0 0.0
  %177 = vmatpush2.msra.mxu0 0.0
  %178 = vmatprep.subr.mxu0 0.0
  %179 = vmatpush2.msra.mxu0 0.0
  %180 = vmatprep.subr.mxu0 0.0
  %181 = vmatpush2.msra.mxu0 0.0
  %182 = vmatprep.subr.mxu0 0.0
  %183 = vmatpush2.msra.mxu0 0.0
  %184 = vmatprep.subr.mxu0 0.0
  %185 = vmatpush2.msra.mxu0 0.0
  %186 = vmatprep.subr.mxu0 0.0
  %187 = vmatpush2.msra.mxu0 0.0
  %188 = vmatprep.subr.mxu0 0.0
  %189 = vmatpush2.msra.mxu0 0.0
  %190 = vmatprep.subr.mxu0 0.0
  %191 = vmatpush2.msra.mxu0 0.0
  %192 = vmatprep.subr.mxu0 0.0
  %193 = vmatpush2.msra.mxu0 0.0
  %194 = vmatprep.mubr.f32.mxu0 0.0
  %195 = vmatmul.mubr.f32.gmra.mxu0 %v128
  %v196 = vpop.f32.mrf.mxu0
  %v197 = vadd.f32 0.0, %v196
  %v198 = vpop.f32.mrf.mxu0
  %199 = vdwg.mxu0
  %v200 = vadd.f32 %v125, %v197
  %v201 = vxor.u32 %v200, 2147483648
  %v202 = vmul.f32 %v201, 1.442695
  %v203 = vpow.pop %v202
  %v204 = vadd.f32 %v203, 1.0
  %v205 = vrcp.pop %v204
  %v206 = vmul.f32 1.0, %v205
  %v207 = vmul.f32 %v206, 2.0
  %v208 = vsub.f32 %v207, 1.0
  %210 = vrot.lane.b32.xlu0 %v124, 32
  %v211 = vpop.permute.xlu0 %210
  %v213 = vmul.f32 %v206, %v211
  %215 = vrot.lane.b32.xlu0 %v208, 64
  %v216 = vpop.permute.xlu0 %215
  %v218 = vmul.f32 %v206, %v216
  %220 = vrot.lane.b32.xlu0 %v218, 32
  %v221 = vpop.permute.xlu0 %220
  %v223 = vadd.f32 %v213, %v221
  %v224 = vtanh.pop %v223
  %226 = vrot.lane.b32.xlu0 %v224, 64
  %v227 = vpop.permute.xlu0 %226
  %v229 = vmul.f32 %v206, %v227
  %231 = vrot.lane.b32.xlu0 %v229, 32
  %v232 = vpop.permute.xlu0 %231
  %234 = vst.msk [vmem:[#allocation3] sm:$0xff] %vm126, %v232
  %s235 = scalar_lea.vmem [#allocation2], 8
  %v236 = vld [vmem:[%s235] sm:$0xff]
  %v237 = vsel %vm126, %v232, 0
  %239 = vmatprep.subr.mxu0 0.0
  %240 = vmatpush1.msra.mxu0 0.0
  %241 = vmatprep.subr.mxu0 0.0
  %242 = vmatpush1.msra.mxu0 0.0
  %243 = vmatprep.subr.mxu0 0.0
  %244 = vmatpush1.msra.mxu0 0.0
  %245 = vmatprep.subr.mxu0 0.0
  %246 = vmatpush1.msra.mxu0 0.0
  %247 = vmatprep.subr.mxu0 0.0
  %248 = vmatpush1.msra.mxu0 0.0
  %249 = vmatprep.subr.mxu0 0.0
  %250 = vmatpush1.msra.mxu0 0.0
  %251 = vmatprep.subr.mxu0 0.0
  %252 = vmatpush1.msra.mxu0 0.0
  %253 = vmatprep.subr.mxu0 0.0
  %254 = vmatpush1.msra.mxu0 0.0
  %255 = vmatprep.subr.mxu0 0.0
  %256 = vmatpush1.msra.mxu0 0.0
  %257 = vmatprep.subr.mxu0 0.0
  %258 = vmatpush1.msra.mxu0 0.0
  %259 = vmatprep.subr.mxu0 0.0
  %260 = vmatpush1.msra.mxu0 0.0
  %261 = vmatprep.subr.mxu0 0.0
  %262 = vmatpush1.msra.mxu0 0.0
  %263 = vmatprep.subr.mxu0 0.0
  %264 = vmatpush1.msra.mxu0 %v122
  %265 = vmatprep.subr.mxu0 0.0
  %266 = vmatpush1.msra.mxu0 %v121
  %267 = vmatprep.subr.mxu0 0.0
  %268 = vmatpush1.msra.mxu0 %v120
  %269 = vmatprep.subr.mxu0 0.0
  %270 = vmatpush1.msra.mxu0 %v119
  %271 = vmatprep.subr.mxu0 0.0
  %272 = vmatpush2.msra.mxu0 0.0
  %273 = vmatprep.subr.mxu0 0.0
  %274 = vmatpush2.msra.mxu0 0.0
  %275 = vmatprep.subr.mxu0 0.0
  %276 = vmatpush2.msra.mxu0 0.0
  %277 = vmatprep.subr.mxu0 0.0
  %278 = vmatpush2.msra.mxu0 0.0
  %279 = vmatprep.subr.mxu0 0.0
  %280 = vmatpush2.msra.mxu0 0.0
  %281 = vmatprep.subr.mxu0 0.0
  %282 = vmatpush2.msra.mxu0 0.0
  %283 = vmatprep.subr.mxu0 0.0
  %284 = vmatpush2.msra.mxu0 0.0
  %285 = vmatprep.subr.mxu0 0.0
  %286 = vmatpush2.msra.mxu0 0.0
  %287 = vmatprep.subr.mxu0 0.0
  %288 = vmatpush2.msra.mxu0 0.0
  %289 = vmatprep.subr.mxu0 0.0
  %290 = vmatpush2.msra.mxu0 0.0
  %291 = vmatprep.subr.mxu0 0.0
  %292 = vmatpush2.msra.mxu0 0.0
  %293 = vmatprep.subr.mxu0 0.0
  %294 = vmatpush2.msra.mxu0 0.0
  %295 = vmatprep.subr.mxu0 0.0
  %296 = vmatpush2.msra.mxu0 0.0
  %297 = vmatprep.subr.mxu0 0.0
  %298 = vmatpush2.msra.mxu0 0.0
  %299 = vmatprep.subr.mxu0 0.0
  %300 = vmatpush2.msra.mxu0 0.0
  %301 = vmatprep.subr.mxu0 0.0
  %302 = vmatpush2.msra.mxu0 0.0
  %303 = vmatprep.mubr.f32.mxu0 0.0
  %304 = vmatmul.mubr.f32.gmra.mxu0 %v237
  %v305 = vpop.f32.mrf.mxu0
  %v306 = vadd.f32 0.0, %v305
  %v307 = vpop.f32.mrf.mxu0
  %308 = vdwg.mxu0
  %v309 = vadd.f32 %v236, %v306
  %v310 = vxor.u32 %v309, 2147483648
  %v311 = vmul.f32 %v310, 1.442695
  %v312 = vpow.pop %v311
  %v313 = vadd.f32 %v312, 1.0
  %v314 = vrcp.pop %v313
  %v315 = vmul.f32 1.0, %v314
  %v316 = vmul.f32 %v315, 2.0
  %v317 = vsub.f32 %v316, 1.0
  %v318 = vmul.f32 %v315, %v223
  %320 = vrot.lane.b32.xlu0 %v317, 64
  %v321 = vpop.permute.xlu0 %320
  %v323 = vmul.f32 %v315, %v321
  %325 = vrot.lane.b32.xlu0 %v323, 32
  %v326 = vpop.permute.xlu0 %325
  %v328 = vadd.f32 %v318, %v326
  %v329 = vtanh.pop %v328
  %331 = vrot.lane.b32.xlu0 %v329, 64
  %v332 = vpop.permute.xlu0 %331
  %v334 = vmul.f32 %v315, %v332
  %336 = vrot.lane.b32.xlu0 %v334, 32
  %v337 = vpop.permute.xlu0 %336
  %s339 = scalar_lea.vmem [#allocation3], 8
  %340 = vst.msk [vmem:[%s339] sm:$0xff] %vm126, %v337
  %s341 = scalar_lea.vmem [#allocation2], 16
  %v342 = vld [vmem:[%s341] sm:$0xff]
  %v343 = vsel %vm126, %v337, 0
  %345 = vmatprep.subr.mxu0 0.0
  %346 = vmatpush1.msra.mxu0 0.0
  %347 = vmatprep.subr.mxu0 0.0
  %348 = vmatpush1.msra.mxu0 0.0
  %349 = vmatprep.subr.mxu0 0.0
  %350 = vmatpush1.msra.mxu0 0.0
  %351 = vmatprep.subr.mxu0 0.0
  %352 = vmatpush1.msra.mxu0 0.0
  %353 = vmatprep.subr.mxu0 0.0
  %354 = vmatpush1.msra.mxu0 0.0
  %355 = vmatprep.subr.mxu0 0.0
  %356 = vmatpush1.msra.mxu0 0.0
  %357 = vmatprep.subr.mxu0 0.0
  %358 = vmatpush1.msra.mxu0 0.0
  %359 = vmatprep.subr.mxu0 0.0
  %360 = vmatpush1.msra.mxu0 0.0
  %361 = vmatprep.subr.mxu0 0.0
  %362 = vmatpush1.msra.mxu0 0.0
  %363 = vmatprep.subr.mxu0 0.0
  %364 = vmatpush1.msra.mxu0 0.0
  %365 = vmatprep.subr.mxu0 0.0
  %366 = vmatpush1.msra.mxu0 0.0
  %367 = vmatprep.subr.mxu0 0.0
  %368 = vmatpush1.msra.mxu0 0.0
  %369 = vmatprep.subr.mxu0 0.0
  %370 = vmatpush1.msra.mxu0 %v122
  %371 = vmatprep.subr.mxu0 0.0
  %372 = vmatpush1.msra.mxu0 %v121
  %373 = vmatprep.subr.mxu0 0.0
  %374 = vmatpush1.msra.mxu0 %v120
  %375 = vmatprep.subr.mxu0 0.0
  %376 = vmatpush1.msra.mxu0 %v119
  %377 = vmatprep.subr.mxu0 0.0
  %378 = vmatpush2.msra.mxu0 0.0
  %379 = vmatprep.subr.mxu0 0.0
  %380 = vmatpush2.msra.mxu0 0.0
  %381 = vmatprep.subr.mxu0 0.0
  %382 = vmatpush2.msra.mxu0 0.0
  %383 = vmatprep.subr.mxu0 0.0
  %384 = vmatpush2.msra.mxu0 0.0
  %385 = vmatprep.subr.mxu0 0.0
  %386 = vmatpush2.msra.mxu0 0.0
  %387 = vmatprep.subr.mxu0 0.0
  %388 = vmatpush2.msra.mxu0 0.0
  %389 = vmatprep.subr.mxu0 0.0
  %390 = vmatpush2.msra.mxu0 0.0
  %391 = vmatprep.subr.mxu0 0.0
  %392 = vmatpush2.msra.mxu0 0.0
  %393 = vmatprep.subr.mxu0 0.0
  %394 = vmatpush2.msra.mxu0 0.0
  %395 = vmatprep.subr.mxu0 0.0
  %396 = vmatpush2.msra.mxu0 0.0
  %397 = vmatprep.subr.mxu0 0.0
  %398 = vmatpush2.msra.mxu0 0.0
  %399 = vmatprep.subr.mxu0 0.0
  %400 = vmatpush2.msra.mxu0 0.0
  %401 = vmatprep.subr.mxu0 0.0
  %402 = vmatpush2.msra.mxu0 0.0
  %403 = vmatprep.subr.mxu0 0.0
  %404 = vmatpush2.msra.mxu0 0.0
  %405 = vmatprep.subr.mxu0 0.0
  %406 = vmatpush2.msra.mxu0 0.0
  %407 = vmatprep.subr.mxu0 0.0
  %408 = vmatpush2.msra.mxu0 0.0
  %409 = vmatprep.mubr.f32.mxu0 0.0
  %410 = vmatmul.mubr.f32.gmra.mxu0 %v343
  %v411 = vpop.f32.mrf.mxu0
  %v412 = vadd.f32 0.0, %v411
  %v413 = vpop.f32.mrf.mxu0
  %414 = vdwg.mxu0
  %v415 = vadd.f32 %v342, %v412
  %v416 = vxor.u32 %v415, 2147483648
  %v417 = vmul.f32 %v416, 1.442695
  %v418 = vpow.pop %v417
  %v419 = vadd.f32 %v418, 1.0
  %v420 = vrcp.pop %v419
  %v421 = vmul.f32 1.0, %v420
  %v422 = vmul.f32 %v421, 2.0
  %v423 = vsub.f32 %v422, 1.0
  %v424 = vmul.f32 %v421, %v328
  %426 = vrot.lane.b32.xlu0 %v423, 64
  %v427 = vpop.permute.xlu0 %426
  %v429 = vmul.f32 %v421, %v427
  %431 = vrot.lane.b32.xlu0 %v429, 32
  %v432 = vpop.permute.xlu0 %431
  %v434 = vadd.f32 %v424, %v432
  %v435 = vtanh.pop %v434
  %437 = vrot.lane.b32.xlu0 %v435, 64
  %v438 = vpop.permute.xlu0 %437
  %v440 = vmul.f32 %v421, %v438
  %442 = vrot.lane.b32.xlu0 %v440, 32
  %v443 = vpop.permute.xlu0 %442
  %s445 = scalar_lea.vmem [#allocation3], 16
  %446 = vst.msk [vmem:[%s445] sm:$0xff] %vm126, %v443
  %s447 = scalar_lea.vmem [#allocation2], 24
  %v448 = vld [vmem:[%s447] sm:$0xff]
  %v449 = vsel %vm126, %v443, 0
  %451 = vmatprep.subr.mxu0 0.0
  %452 = vmatpush1.msra.mxu0 0.0
  %453 = vmatprep.subr.mxu0 0.0
  %454 = vmatpush1.msra.mxu0 0.0
  %455 = vmatprep.subr.mxu0 0.0
  %456 = vmatpush1.msra.mxu0 0.0
  %457 = vmatprep.subr.mxu0 0.0
  %458 = vmatpush1.msra.mxu0 0.0
  %459 = vmatprep.subr.mxu0 0.0
  %460 = vmatpush1.msra.mxu0 0.0
  %461 = vmatprep.subr.mxu0 0.0
  %462 = vmatpush1.msra.mxu0 0.0
  %463 = vmatprep.subr.mxu0 0.0
  %464 = vmatpush1.msra.mxu0 0.0
  %465 = vmatprep.subr.mxu0 0.0
  %466 = vmatpush1.msra.mxu0 0.0
  %467 = vmatprep.subr.mxu0 0.0
  %468 = vmatpush1.msra.mxu0 0.0
  %469 = vmatprep.subr.mxu0 0.0
  %470 = vmatpush1.msra.mxu0 0.0
  %471 = vmatprep.subr.mxu0 0.0
  %472 = vmatpush1.msra.mxu0 0.0
  %473 = vmatprep.subr.mxu0 0.0
  %474 = vmatpush1.msra.mxu0 0.0
  %475 = vmatprep.subr.mxu0 0.0
  %476 = vmatpush1.msra.mxu0 %v122
  %477 = vmatprep.subr.mxu0 0.0
  %478 = vmatpush1.msra.mxu0 %v121
  %479 = vmatprep.subr.mxu0 0.0
  %480 = vmatpush1.msra.mxu0 %v120
  %481 = vmatprep.subr.mxu0 0.0
  %482 = vmatpush1.msra.mxu0 %v119
  %483 = vmatprep.subr.mxu0 0.0
  %484 = vmatpush2.msra.mxu0 0.0
  %485 = vmatprep.subr.mxu0 0.0
  %486 = vmatpush2.msra.mxu0 0.0
  %487 = vmatprep.subr.mxu0 0.0
  %488 = vmatpush2.msra.mxu0 0.0
  %489 = vmatprep.subr.mxu0 0.0
  %490 = vmatpush2.msra.mxu0 0.0
  %491 = vmatprep.subr.mxu0 0.0
  %492 = vmatpush2.msra.mxu0 0.0
  %493 = vmatprep.subr.mxu0 0.0
  %494 = vmatpush2.msra.mxu0 0.0
  %495 = vmatprep.subr.mxu0 0.0
  %496 = vmatpush2.msra.mxu0 0.0
  %497 = vmatprep.subr.mxu0 0.0
  %498 = vmatpush2.msra.mxu0 0.0
  %499 = vmatprep.subr.mxu0 0.0
  %500 = vmatpush2.msra.mxu0 0.0
  %501 = vmatprep.subr.mxu0 0.0
  %502 = vmatpush2.msra.mxu0 0.0
  %503 = vmatprep.subr.mxu0 0.0
  %504 = vmatpush2.msra.mxu0 0.0
  %505 = vmatprep.subr.mxu0 0.0
  %506 = vmatpush2.msra.mxu0 0.0
  %507 = vmatprep.subr.mxu0 0.0
  %508 = vmatpush2.msra.mxu0 0.0
  %509 = vmatprep.subr.mxu0 0.0
  %510 = vmatpush2.msra.mxu0 0.0
  %511 = vmatprep.subr.mxu0 0.0
  %512 = vmatpush2.msra.mxu0 0.0
  %513 = vmatprep.subr.mxu0 0.0
  %514 = vmatpush2.msra.mxu0 0.0
  %515 = vmatprep.mubr.f32.mxu0 0.0
  %516 = vmatmul.mubr.f32.gmra.mxu0 %v449
  %v517 = vpop.f32.mrf.mxu0
  %v518 = vadd.f32 0.0, %v517
  %v519 = vpop.f32.mrf.mxu0
  %520 = vdwg.mxu0
  %v521 = vadd.f32 %v448, %v518
  %v522 = vxor.u32 %v521, 2147483648
  %v523 = vmul.f32 %v522, 1.442695
  %v524 = vpow.pop %v523
  %v525 = vadd.f32 %v524, 1.0
  %v526 = vrcp.pop %v525
  %v527 = vmul.f32 1.0, %v526
  %v528 = vmul.f32 %v527, 2.0
  %v529 = vsub.f32 %v528, 1.0
  %v530 = vmul.f32 %v527, %v434
  %532 = vrot.lane.b32.xlu0 %v529, 64
  %v533 = vpop.permute.xlu0 %532
  %v535 = vmul.f32 %v527, %v533
  %537 = vrot.lane.b32.xlu0 %v535, 32
  %v538 = vpop.permute.xlu0 %537
  %v540 = vadd.f32 %v530, %v538
  %v541 = vtanh.pop %v540
  %543 = vrot.lane.b32.xlu0 %v541, 64
  %v544 = vpop.permute.xlu0 %543
  %v546 = vmul.f32 %v527, %v544
  %548 = vrot.lane.b32.xlu0 %v546, 32
  %v549 = vpop.permute.xlu0 %548
  %s551 = scalar_lea.vmem [#allocation3], 24
  %552 = vst.msk [vmem:[%s551] sm:$0xff] %vm126, %v549
  %s553 = scalar_lea.vmem [#allocation2], 32
  %v554 = vld [vmem:[%s553] sm:$0xff]
  %v555 = vsel %vm126, %v549, 0
  %557 = vmatprep.subr.mxu0 0.0
  %558 = vmatpush1.msra.mxu0 0.0
  %559 = vmatprep.subr.mxu0 0.0
  %560 = vmatpush1.msra.mxu0 0.0
  %561 = vmatprep.subr.mxu0 0.0
  %562 = vmatpush1.msra.mxu0 0.0
  %563 = vmatprep.subr.mxu0 0.0
  %564 = vmatpush1.msra.mxu0 0.0
  %565 = vmatprep.subr.mxu0 0.0
  %566 = vmatpush1.msra.mxu0 0.0
  %567 = vmatprep.subr.mxu0 0.0
  %568 = vmatpush1.msra.mxu0 0.0
  %569 = vmatprep.subr.mxu0 0.0
  %570 = vmatpush1.msra.mxu0 0.0
  %571 = vmatprep.subr.mxu0 0.0
  %572 = vmatpush1.msra.mxu0 0.0
  %573 = vmatprep.subr.mxu0 0.0
  %574 = vmatpush1.msra.mxu0 0.0
  %575 = vmatprep.subr.mxu0 0.0
  %576 = vmatpush1.msra.mxu0 0.0
  %577 = vmatprep.subr.mxu0 0.0
  %578 = vmatpush1.msra.mxu0 0.0
  %579 = vmatprep.subr.mxu0 0.0
  %580 = vmatpush1.msra.mxu0 0.0
  %581 = vmatprep.subr.mxu0 0.0
  %582 = vmatpush1.msra.mxu0 %v122
  %583 = vmatprep.subr.mxu0 0.0
  %584 = vmatpush1.msra.mxu0 %v121
  %585 = vmatprep.subr.mxu0 0.0
  %586 = vmatpush1.msra.mxu0 %v120
  %587 = vmatprep.subr.mxu0 0.0
  %588 = vmatpush1.msra.mxu0 %v119
  %589 = vmatprep.subr.mxu0 0.0
  %590 = vmatpush2.msra.mxu0 0.0
  %591 = vmatprep.subr.mxu0 0.0
  %592 = vmatpush2.msra.mxu0 0.0
  %593 = vmatprep.subr.mxu0 0.0
  %594 = vmatpush2.msra.mxu0 0.0
  %595 = vmatprep.subr.mxu0 0.0
  %596 = vmatpush2.msra.mxu0 0.0
  %597 = vmatprep.subr.mxu0 0.0
  %598 = vmatpush2.msra.mxu0 0.0
  %599 = vmatprep.subr.mxu0 0.0
  %600 = vmatpush2.msra.mxu0 0.0
  %601 = vmatprep.subr.mxu0 0.0
  %602 = vmatpush2.msra.mxu0 0.0
  %603 = vmatprep.subr.mxu0 0.0
  %604 = vmatpush2.msra.mxu0 0.0
  %605 = vmatprep.subr.mxu0 0.0
  %606 = vmatpush2.msra.mxu0 0.0
  %607 = vmatprep.subr.mxu0 0.0
  %608 = vmatpush2.msra.mxu0 0.0
  %609 = vmatprep.subr.mxu0 0.0
  %610 = vmatpush2.msra.mxu0 0.0
  %611 = vmatprep.subr.mxu0 0.0
  %612 = vmatpush2.msra.mxu0 0.0
  %613 = vmatprep.subr.mxu0 0.0
  %614 = vmatpush2.msra.mxu0 0.0
  %615 = vmatprep.subr.mxu0 0.0
  %616 = vmatpush2.msra.mxu0 0.0
  %617 = vmatprep.subr.mxu0 0.0
  %618 = vmatpush2.msra.mxu0 0.0
  %619 = vmatprep.subr.mxu0 0.0
  %620 = vmatpush2.msra.mxu0 0.0
  %621 = vmatprep.mubr.f32.mxu0 0.0
  %622 = vmatmul.mubr.f32.gmra.mxu0 %v555
  %v623 = vpop.f32.mrf.mxu0
  %v624 = vadd.f32 0.0, %v623
  %v625 = vpop.f32.mrf.mxu0
  %626 = vdwg.mxu0
  %v627 = vadd.f32 %v554, %v624
  %v628 = vxor.u32 %v627, 2147483648
  %v629 = vmul.f32 %v628, 1.442695
  %v630 = vpow.pop %v629
  %v631 = vadd.f32 %v630, 1.0
  %v632 = vrcp.pop %v631
  %v633 = vmul.f32 1.0, %v632
  %v634 = vmul.f32 %v633, 2.0
  %v635 = vsub.f32 %v634, 1.0
  %v636 = vmul.f32 %v633, %v540
  %638 = vrot.lane.b32.xlu0 %v635, 64
  %v639 = vpop.permute.xlu0 %638
  %v641 = vmul.f32 %v633, %v639
  %643 = vrot.lane.b32.xlu0 %v641, 32
  %v644 = vpop.permute.xlu0 %643
  %v646 = vadd.f32 %v636, %v644
  %v647 = vtanh.pop %v646
  %649 = vrot.lane.b32.xlu0 %v647, 64
  %v650 = vpop.permute.xlu0 %649
  %v652 = vmul.f32 %v633, %v650
  %654 = vrot.lane.b32.xlu0 %v652, 32
  %v655 = vpop.permute.xlu0 %654
  %s657 = scalar_lea.vmem [#allocation3], 32
  %658 = vst.msk [vmem:[%s657] sm:$0xff] %vm126, %v655
  %s659 = scalar_lea.vmem [#allocation2], 40
  %v660 = vld [vmem:[%s659] sm:$0xff]
  %v661 = vsel %vm126, %v655, 0
  %663 = vmatprep.subr.mxu0 0.0
  %664 = vmatpush1.msra.mxu0 0.0
  %665 = vmatprep.subr.mxu0 0.0
  %666 = vmatpush1.msra.mxu0 0.0
  %667 = vmatprep.subr.mxu0 0.0
  %668 = vmatpush1.msra.mxu0 0.0
  %669 = vmatprep.subr.mxu0 0.0
  %670 = vmatpush1.msra.mxu0 0.0
  %671 = vmatprep.subr.mxu0 0.0
  %672 = vmatpush1.msra.mxu0 0.0
  %673 = vmatprep.subr.mxu0 0.0
  %674 = vmatpush1.msra.mxu0 0.0
  %675 = vmatprep.subr.mxu0 0.0
  %676 = vmatpush1.msra.mxu0 0.0
  %677 = vmatprep.subr.mxu0 0.0
  %678 = vmatpush1.msra.mxu0 0.0
  %679 = vmatprep.subr.mxu0 0.0
  %680 = vmatpush1.msra.mxu0 0.0
  %681 = vmatprep.subr.mxu0 0.0
  %682 = vmatpush1.msra.mxu0 0.0
  %683 = vmatprep.subr.mxu0 0.0
  %684 = vmatpush1.msra.mxu0 0.0
  %685 = vmatprep.subr.mxu0 0.0
  %686 = vmatpush1.msra.mxu0 0.0
  %687 = vmatprep.subr.mxu0 0.0
  %688 = vmatpush1.msra.mxu0 %v122
  %689 = vmatprep.subr.mxu0 0.0
  %690 = vmatpush1.msra.mxu0 %v121
  %691 = vmatprep.subr.mxu0 0.0
  %692 = vmatpush1.msra.mxu0 %v120
  %693 = vmatprep.subr.mxu0 0.0
  %694 = vmatpush1.msra.mxu0 %v119
  %695 = vmatprep.subr.mxu0 0.0
  %696 = vmatpush2.msra.mxu0 0.0
  %697 = vmatprep.subr.mxu0 0.0
  %698 = vmatpush2.msra.mxu0 0.0
  %699 = vmatprep.subr.mxu0 0.0
  %700 = vmatpush2.msra.mxu0 0.0
  %701 = vmatprep.subr.mxu0 0.0
  %702 = vmatpush2.msra.mxu0 0.0
  %703 = vmatprep.subr.mxu0 0.0
  %704 = vmatpush2.msra.mxu0 0.0
  %705 = vmatprep.subr.mxu0 0.0
  %706 = vmatpush2.msra.mxu0 0.0
  %707 = vmatprep.subr.mxu0 0.0
  %708 = vmatpush2.msra.mxu0 0.0
  %709 = vmatprep.subr.mxu0 0.0
  %710 = vmatpush2.msra.mxu0 0.0
  %711 = vmatprep.subr.mxu0 0.0
  %712 = vmatpush2.msra.mxu0 0.0
  %713 = vmatprep.subr.mxu0 0.0
  %714 = vmatpush2.msra.mxu0 0.0
  %715 = vmatprep.subr.mxu0 0.0
  %716 = vmatpush2.msra.mxu0 0.0
  %717 = vmatprep.subr.mxu0 0.0
  %718 = vmatpush2.msra.mxu0 0.0
  %719 = vmatprep.subr.mxu0 0.0
  %720 = vmatpush2.msra.mxu0 0.0
  %721 = vmatprep.subr.mxu0 0.0
  %722 = vmatpush2.msra.mxu0 0.0
  %723 = vmatprep.subr.mxu0 0.0
  %724 = vmatpush2.msra.mxu0 0.0
  %725 = vmatprep.subr.mxu0 0.0
  %726 = vmatpush2.msra.mxu0 0.0
  %727 = vmatprep.mubr.f32.mxu0 0.0
  %728 = vmatmul.mubr.f32.gmra.mxu0 %v661
  %v729 = vpop.f32.mrf.mxu0
  %v730 = vadd.f32 0.0, %v729
  %v731 = vpop.f32.mrf.mxu0
  %732 = vdwg.mxu0
  %v733 = vadd.f32 %v660, %v730
  %v734 = vxor.u32 %v733, 2147483648
  %v735 = vmul.f32 %v734, 1.442695
  %v736 = vpow.pop %v735
  %v737 = vadd.f32 %v736, 1.0
  %v738 = vrcp.pop %v737
  %v739 = vmul.f32 1.0, %v738
  %v740 = vmul.f32 %v739, 2.0
  %v741 = vsub.f32 %v740, 1.0
  %v742 = vmul.f32 %v739, %v646
  %744 = vrot.lane.b32.xlu0 %v741, 64
  %v745 = vpop.permute.xlu0 %744
  %v747 = vmul.f32 %v739, %v745
  %749 = vrot.lane.b32.xlu0 %v747, 32
  %v750 = vpop.permute.xlu0 %749
  %v752 = vadd.f32 %v742, %v750
  %v753 = vtanh.pop %v752
  %755 = vrot.lane.b32.xlu0 %v753, 64
  %v756 = vpop.permute.xlu0 %755
  %v758 = vmul.f32 %v739, %v756
  %760 = vrot.lane.b32.xlu0 %v758, 32
  %v761 = vpop.permute.xlu0 %760
  %s763 = scalar_lea.vmem [#allocation3], 40
  %764 = vst.msk [vmem:[%s763] sm:$0xff] %vm126, %v761
  %s765 = scalar_lea.vmem [#allocation2], 48
  %v766 = vld [vmem:[%s765] sm:$0xff]
  %v767 = vsel %vm126, %v761, 0
  %769 = vmatprep.subr.mxu0 0.0
  %770 = vmatpush1.msra.mxu0 0.0
  %771 = vmatprep.subr.mxu0 0.0
  %772 = vmatpush1.msra.mxu0 0.0
  %773 = vmatprep.subr.mxu0 0.0
  %774 = vmatpush1.msra.mxu0 0.0
  %775 = vmatprep.subr.mxu0 0.0
  %776 = vmatpush1.msra.mxu0 0.0
  %777 = vmatprep.subr.mxu0 0.0
  %778 = vmatpush1.msra.mxu0 0.0
  %779 = vmatprep.subr.mxu0 0.0
  %780 = vmatpush1.msra.mxu0 0.0
  %781 = vmatprep.subr.mxu0 0.0
  %782 = vmatpush1.msra.mxu0 0.0
  %783 = vmatprep.subr.mxu0 0.0
  %784 = vmatpush1.msra.mxu0 0.0
  %785 = vmatprep.subr.mxu0 0.0
  %786 = vmatpush1.msra.mxu0 0.0
  %787 = vmatprep.subr.mxu0 0.0
  %788 = vmatpush1.msra.mxu0 0.0
  %789 = vmatprep.subr.mxu0 0.0
  %790 = vmatpush1.msra.mxu0 0.0
  %791 = vmatprep.subr.mxu0 0.0
  %792 = vmatpush1.msra.mxu0 0.0
  %793 = vmatprep.subr.mxu0 0.0
  %794 = vmatpush1.msra.mxu0 %v122
  %795 = vmatprep.subr.mxu0 0.0
  %796 = vmatpush1.msra.mxu0 %v121
  %797 = vmatprep.subr.mxu0 0.0
  %798 = vmatpush1.msra.mxu0 %v120
  %799 = vmatprep.subr.mxu0 0.0
  %800 = vmatpush1.msra.mxu0 %v119
  %801 = vmatprep.subr.mxu0 0.0
  %802 = vmatpush2.msra.mxu0 0.0
  %803 = vmatprep.subr.mxu0 0.0
  %804 = vmatpush2.msra.mxu0 0.0
  %805 = vmatprep.subr.mxu0 0.0
  %806 = vmatpush2.msra.mxu0 0.0
  %807 = vmatprep.subr.mxu0 0.0
  %808 = vmatpush2.msra.mxu0 0.0
  %809 = vmatprep.subr.mxu0 0.0
  %810 = vmatpush2.msra.mxu0 0.0
  %811 = vmatprep.subr.mxu0 0.0
  %812 = vmatpush2.msra.mxu0 0.0
  %813 = vmatprep.subr.mxu0 0.0
  %814 = vmatpush2.msra.mxu0 0.0
  %815 = vmatprep.subr.mxu0 0.0
  %816 = vmatpush2.msra.mxu0 0.0
  %817 = vmatprep.subr.mxu0 0.0
  %818 = vmatpush2.msra.mxu0 0.0
  %819 = vmatprep.subr.mxu0 0.0
  %820 = vmatpush2.msra.mxu0 0.0
  %821 = vmatprep.subr.mxu0 0.0
  %822 = vmatpush2.msra.mxu0 0.0
  %823 = vmatprep.subr.mxu0 0.0
  %824 = vmatpush2.msra.mxu0 0.0
  %825 = vmatprep.subr.mxu0 0.0
  %826 = vmatpush2.msra.mxu0 0.0
  %827 = vmatprep.subr.mxu0 0.0
  %828 = vmatpush2.msra.mxu0 0.0
  %829 = vmatprep.subr.mxu0 0.0
  %830 = vmatpush2.msra.mxu0 0.0
  %831 = vmatprep.subr.mxu0 0.0
  %832 = vmatpush2.msra.mxu0 0.0
  %833 = vmatprep.mubr.f32.mxu0 0.0
  %834 = vmatmul.mubr.f32.gmra.mxu0 %v767
  %v835 = vpop.f32.mrf.mxu0
  %v836 = vadd.f32 0.0, %v835
  %v837 = vpop.f32.mrf.mxu0
  %838 = vdwg.mxu0
  %v839 = vadd.f32 %v766, %v836
  %v840 = vxor.u32 %v839, 2147483648
  %v841 = vmul.f32 %v840, 1.442695
  %v842 = vpow.pop %v841
  %v843 = vadd.f32 %v842, 1.0
  %v844 = vrcp.pop %v843
  %v845 = vmul.f32 1.0, %v844
  %v846 = vmul.f32 %v845, 2.0
  %v847 = vsub.f32 %v846, 1.0
  %v848 = vmul.f32 %v845, %v752
  %850 = vrot.lane.b32.xlu0 %v847, 64
  %v851 = vpop.permute.xlu0 %850
  %v853 = vmul.f32 %v845, %v851
  %855 = vrot.lane.b32.xlu0 %v853, 32
  %v856 = vpop.permute.xlu0 %855
  %v858 = vadd.f32 %v848, %v856
  %v859 = vtanh.pop %v858
  %861 = vrot.lane.b32.xlu0 %v859, 64
  %v862 = vpop.permute.xlu0 %861
  %v864 = vmul.f32 %v845, %v862
  %866 = vrot.lane.b32.xlu0 %v864, 32
  %v867 = vpop.permute.xlu0 %866
  %s869 = scalar_lea.vmem [#allocation3], 48
  %870 = vst.msk [vmem:[%s869] sm:$0xff] %vm126, %v867
  %s871 = scalar_lea.vmem [#allocation2], 56
  %v872 = vld [vmem:[%s871] sm:$0xff]
  %v873 = vsel %vm126, %v867, 0
  %875 = vmatprep.subr.mxu0 0.0
  %876 = vmatpush1.msra.mxu0 0.0
  %877 = vmatprep.subr.mxu0 0.0
  %878 = vmatpush1.msra.mxu0 0.0
  %879 = vmatprep.subr.mxu0 0.0
  %880 = vmatpush1.msra.mxu0 0.0
  %881 = vmatprep.subr.mxu0 0.0
  %882 = vmatpush1.msra.mxu0 0.0
  %883 = vmatprep.subr.mxu0 0.0
  %884 = vmatpush1.msra.mxu0 0.0
  %885 = vmatprep.subr.mxu0 0.0
  %886 = vmatpush1.msra.mxu0 0.0
  %887 = vmatprep.subr.mxu0 0.0
  %888 = vmatpush1.msra.mxu0 0.0
  %889 = vmatprep.subr.mxu0 0.0
  %890 = vmatpush1.msra.mxu0 0.0
  %891 = vmatprep.subr.mxu0 0.0
  %892 = vmatpush1.msra.mxu0 0.0
  %893 = vmatprep.subr.mxu0 0.0
  %894 = vmatpush1.msra.mxu0 0.0
  %895 = vmatprep.subr.mxu0 0.0
  %896 = vmatpush1.msra.mxu0 0.0
  %897 = vmatprep.subr.mxu0 0.0
  %898 = vmatpush1.msra.mxu0 0.0
  %899 = vmatprep.subr.mxu0 0.0
  %900 = vmatpush1.msra.mxu0 %v122
  %901 = vmatprep.subr.mxu0 0.0
  %902 = vmatpush1.msra.mxu0 %v121
  %903 = vmatprep.subr.mxu0 0.0
  %904 = vmatpush1.msra.mxu0 %v120
  %905 = vmatprep.subr.mxu0 0.0
  %906 = vmatpush1.msra.mxu0 %v119
  %907 = vmatprep.subr.mxu0 0.0
  %908 = vmatpush2.msra.mxu0 0.0
  %909 = vmatprep.subr.mxu0 0.0
  %910 = vmatpush2.msra.mxu0 0.0
  %911 = vmatprep.subr.mxu0 0.0
  %912 = vmatpush2.msra.mxu0 0.0
  %913 = vmatprep.subr.mxu0 0.0
  %914 = vmatpush2.msra.mxu0 0.0
  %915 = vmatprep.subr.mxu0 0.0
  %916 = vmatpush2.msra.mxu0 0.0
  %917 = vmatprep.subr.mxu0 0.0
  %918 = vmatpush2.msra.mxu0 0.0
  %919 = vmatprep.subr.mxu0 0.0
  %920 = vmatpush2.msra.mxu0 0.0
  %921 = vmatprep.subr.mxu0 0.0
  %922 = vmatpush2.msra.mxu0 0.0
  %923 = vmatprep.subr.mxu0 0.0
  %924 = vmatpush2.msra.mxu0 0.0
  %925 = vmatprep.subr.mxu0 0.0
  %926 = vmatpush2.msra.mxu0 0.0
  %927 = vmatprep.subr.mxu0 0.0
  %928 = vmatpush2.msra.mxu0 0.0
  %929 = vmatprep.subr.mxu0 0.0
  %930 = vmatpush2.msra.mxu0 0.0
  %931 = vmatprep.subr.mxu0 0.0
  %932 = vmatpush2.msra.mxu0 0.0
  %933 = vmatprep.subr.mxu0 0.0
  %934 = vmatpush2.msra.mxu0 0.0
  %935 = vmatprep.subr.mxu0 0.0
  %936 = vmatpush2.msra.mxu0 0.0
  %937 = vmatprep.subr.mxu0 0.0
  %938 = vmatpush2.msra.mxu0 0.0
  %939 = vmatprep.mubr.f32.mxu0 0.0
  %940 = vmatmul.mubr.f32.gmra.mxu0 %v873
  %v941 = vpop.f32.mrf.mxu0
  %v942 = vadd.f32 0.0, %v941
  %v943 = vpop.f32.mrf.mxu0
  %944 = vdwg.mxu0
  %v945 = vadd.f32 %v872, %v942
  %v946 = vxor.u32 %v945, 2147483648
  %v947 = vmul.f32 %v946, 1.442695
  %v948 = vpow.pop %v947
  %v949 = vadd.f32 %v948, 1.0
  %v950 = vrcp.pop %v949
  %v951 = vmul.f32 1.0, %v950
  %v952 = vmul.f32 %v951, 2.0
  %v953 = vsub.f32 %v952, 1.0
  %v954 = vmul.f32 %v951, %v858
  %956 = vrot.lane.b32.xlu0 %v953, 64
  %v957 = vpop.permute.xlu0 %956
  %v959 = vmul.f32 %v951, %v957
  %961 = vrot.lane.b32.xlu0 %v959, 32
  %v962 = vpop.permute.xlu0 %961
  %v964 = vadd.f32 %v954, %v962
  %v965 = vtanh.pop %v964
  %967 = vrot.lane.b32.xlu0 %v965, 64
  %v968 = vpop.permute.xlu0 %967
  %v970 = vmul.f32 %v951, %v968
  %972 = vrot.lane.b32.xlu0 %v970, 32
  %v973 = vpop.permute.xlu0 %972
  %s975 = scalar_lea.vmem [#allocation3], 56
  %976 = vst.msk [vmem:[%s975] sm:$0xff] %vm126, %v973
  %977 = vst.msk [vmem:[%s9] sm:$0xff] %vm126, %v973
  %979 = vrot.lane.b32.xlu0 %v964, 96
  %v980 = vpop.permute.xlu0 %979
  %982 = vst.msk [vmem:[%s10] sm:$0xff] %vm126, %v980
  %v983 = vld [vmem:[%s6] sm:$0x1]
  %v984 = vld [vmem:[#allocation3] sm:$0xff]
  %v985 = vld [vmem:[#allocation3 + $0x8] sm:$0xff]
  %v986 = vld [vmem:[#allocation3 + $0x10] sm:$0xff]
  %v987 = vld [vmem:[#allocation3 + $0x18] sm:$0xff]
  %v988 = vld [vmem:[#allocation3 + $0x20] sm:$0xff]
  %v989 = vld [vmem:[#allocation3 + $0x28] sm:$0xff]
  %v990 = vld [vmem:[#allocation3 + $0x30] sm:$0xff]
  %v991 = vld [vmem:[#allocation3 + $0x38] sm:$0xff]
  %v993 = vlaneseq
  %v994 = vshrl.u32 %v993, 7
  %v995 = vsub.s32 0, %v994
  %v996 = vrot.slane %v983, %v995
  %v998 = vmul.f32 %v984, %v996
  %v999 = vmul.f32 %v985, %v996
  %v1000 = vmul.f32 %v986, %v996
  %v1001 = vmul.f32 %v987, %v996
  %v1002 = vmul.f32 %v988, %v996
  %v1003 = vmul.f32 %v989, %v996
  %v1004 = vmul.f32 %v990, %v996
  %v1005 = vmul.f32 %v991, %v996
  %v1006 = vsel %vm126, %v998, 0.0
  %1007 = vadd.xlane.f32.xlu0 %v1006
  %v1008 = vpop.xlane.xlu0 %1007
  %v1009 = vsel %vm126, %v999, 0.0
  %1010 = vadd.xlane.f32.xlu0 %v1009
  %v1011 = vpop.xlane.xlu0 %1010
  %v1012 = vsel %vm126, %v1000, 0.0
  %1013 = vadd.xlane.f32.xlu0 %v1012
  %v1014 = vpop.xlane.xlu0 %1013
  %v1015 = vsel %vm126, %v1001, 0.0
  %1016 = vadd.xlane.f32.xlu0 %v1015
  %v1017 = vpop.xlane.xlu0 %1016
  %v1018 = vsel %vm126, %v1002, 0.0
  %1019 = vadd.xlane.f32.xlu0 %v1018
  %v1020 = vpop.xlane.xlu0 %1019
  %v1021 = vsel %vm126, %v1003, 0.0
  %1022 = vadd.xlane.f32.xlu0 %v1021
  %v1023 = vpop.xlane.xlu0 %1022
  %v1024 = vsel %vm126, %v1004, 0.0
  %1025 = vadd.xlane.f32.xlu0 %v1024
  %v1026 = vpop.xlane.xlu0 %1025
  %v1027 = vsel %vm126, %v1005, 0.0
  %1028 = vadd.xlane.f32.xlu0 %v1027
  %v1029 = vpop.xlane.xlu0 %1028
  %s1030 = sld [smem:[#allocation4]]
  %v1031 = vstv %s1030
  %v1032 = vadd.f32 %v1008, %v1031
  %v1033 = vadd.f32 %v1011, %v1031
  %v1034 = vadd.f32 %v1014, %v1031
  %v1035 = vadd.f32 %v1017, %v1031
  %v1036 = vadd.f32 %v1020, %v1031
  %v1037 = vadd.f32 %v1023, %v1031
  %v1038 = vadd.f32 %v1026, %v1031
  %v1039 = vadd.f32 %v1029, %v1031
  %v1048 = vlaneseq
  %v1049 = vand.u32 %v1048, 127
  %v1050 = vlaneseq
  %v1051 = vshrl.u32 %v1050, 7
  %v1052 = vsub.s32 %v1049, %v1051
  %v1053 = vrot.slane %v1032, %v1052
  %v1054 = vlaneseq
  %v1055 = vshrl.u32 %v1054, 7
  %v1056 = vsub.s32 %v1049, %v1055
  %v1057 = vrot.slane %v1033, %v1056
  %v1058 = vlaneseq
  %v1059 = vshrl.u32 %v1058, 7
  %v1060 = vsub.s32 %v1049, %v1059
  %v1061 = vrot.slane %v1034, %v1060
  %v1062 = vlaneseq
  %v1063 = vshrl.u32 %v1062, 7
  %v1064 = vsub.s32 %v1049, %v1063
  %v1065 = vrot.slane %v1035, %v1064
  %v1066 = vlaneseq
  %v1067 = vshrl.u32 %v1066, 7
  %v1068 = vsub.s32 %v1049, %v1067
  %v1069 = vrot.slane %v1036, %v1068
  %v1070 = vlaneseq
  %v1071 = vshrl.u32 %v1070, 7
  %v1072 = vsub.s32 %v1049, %v1071
  %v1073 = vrot.slane %v1037, %v1072
  %v1074 = vlaneseq
  %v1075 = vshrl.u32 %v1074, 7
  %v1076 = vsub.s32 %v1049, %v1075
  %v1077 = vrot.slane %v1038, %v1076
  %v1078 = vlaneseq
  %v1079 = vshrl.u32 %v1078, 7
  %v1080 = vsub.s32 %v1049, %v1079
  %v1081 = vrot.slane %v1039, %v1080
  %vm1082 = vcmask 1041409
  %v1083 = vsel %vm1082, %v1057, %v1053
  %vm1084 = vcmask 1042434
  %v1085 = vsel %vm1084, %v1061, %v1083
  %vm1086 = vcmask 1043459
  %v1087 = vsel %vm1086, %v1065, %v1085
  %vm1088 = vcmask 1044484
  %v1089 = vsel %vm1088, %v1069, %v1087
  %vm1090 = vcmask 1045509
  %v1091 = vsel %vm1090, %v1073, %v1089
  %vm1092 = vcmask 1046534
  %v1093 = vsel %vm1092, %v1077, %v1091
  %vm1094 = vcmask 1047559
  %v1095 = vsel %vm1094, %v1081, %v1093
  %vm1097 = vcmask 64512
  %1098 = vst.msk [vmem:[%s8] sm:$0xff] %vm1097, %v1095
  // Predicated region
  $region34: #{rnn_forward.1} parent=0 // pred_check
    _
  $region35: #{rnn_forward.1} parent=0 // pred_check_branch
    %1100 = sbr.rel (0) target = $region37
  $region36: #{rnn_forward.1} parent=0 // pred_region
    _
  $region37: #{rnn_forward.1} parent=0 // pred_fallthru
    _
  // Predicated region
  $region38: #{rnn_forward.1} parent=0 // pred_check
    _
  $region39: #{rnn_forward.1} parent=0 // pred_check_branch
    %1102 = sbr.rel (0) target = $region41
  $region40: #{rnn_forward.1} parent=0 // pred_region
    _
  $region41: #{rnn_forward.1} parent=0 // pred_fallthru
    _
  // Predicated region
  $region42: #{rnn_forward.1} parent=0 // pred_check
    _
  $region43: #{rnn_forward.1} parent=0 // pred_check_branch
    %1104 = sbr.rel (0) target = $region45
  $region44: #{rnn_forward.1} parent=0 // pred_region
    _
  $region45: #{rnn_forward.1} parent=0 // pred_fallthru
    _
  // Predicated region
  $region46: #{rnn_forward.1} parent=0 // pred_check
    _
  $region47: #{rnn_forward.1} parent=0 // pred_check_branch
    %1106 = sbr.rel (0) target = $region49
  $region48: #{rnn_forward.1} parent=0 // pred_region
    _
  $region49: #{rnn_forward.1} parent=0 // pred_fallthru
    _
  // Predicated region
  $region50: #{rnn_forward.1} parent=0 // pred_check
    _
  $region51: #{rnn_forward.1} parent=0 // pred_check_branch
    %1108 = sbr.rel (0) target = $region53
  $region52: #{rnn_forward.1} parent=0 // pred_region
    _
  $region53: #{rnn_forward.1} parent=0 // pred_fallthru
    _
  // Predicated region
  $region54: #{rnn_forward.1} parent=0 // pred_check
    _
  $region55: #{rnn_forward.1} parent=0 // pred_check_branch
    %1110 = sbr.rel (0) target = $region57
  $region56: #{rnn_forward.1} parent=0 // pred_region
    _
  $region57: #{rnn_forward.1} parent=0 // pred_fallthru
    _

</llo_original>
